<compile_context>
chip_gen: v7x
topology: tpu7x:2x2x1
jax: 0.10.0
libtpu: 0.0.40
codegen_flags: <defaults>
</compile_context>

<pallas_src>
import jax
import jax.numpy as jnp
import numpy as np
from jax.experimental import pallas as pl
from jax.experimental.pallas import tpu as pltpu


def _make_rnn_kernel(S, B_pad, I, H):
    """Single-invocation kernel: whole sequence, both RNN layers, final FC."""

    def kernel(x_ref,    # (S*B_pad, I)  seq-major flattened (padded) input
               w_ref,    # (I+4H, H)     [wih0 ; whh0.T ; wih1.T ; whh1.T ; wfc_pad]
               b_ref,    # (3, H)        [b_ih0+b_hh0 ; b_ih1+b_hh1 ; b_fc_pad]
               out_ref): # (B_pad, H)    fc output (lanes >= O are zero)
        # Static (free) ref slices of the packed slabs.
        wih0 = w_ref[0:I, :]
        whh0 = w_ref[I:I + H, :]
        w_l1 = w_ref[I + H:I + 3 * H, :]          # fused [wih1.T ; whh1.T]
        wfc  = w_ref[I + 3 * H:I + 4 * H, :]      # (H, H), zero-padded lanes
        b0   = b_ref[0:1, :]
        b1   = b_ref[1:2, :]
        bfc  = b_ref[2:3, :]

        # Hoisted layer-0 input projection for ALL timesteps: one MXU matmul.
        xw = jnp.dot(x_ref[...], wih0,
                     preferred_element_type=jnp.float32) + b0       # (S*B_pad, H)

        h0 = jnp.zeros((B_pad, H), jnp.float32)
        h1 = jnp.zeros((B_pad, H), jnp.float32)

        # S is small & static -> fully unrolled recurrence; hidden states stay
        # in vector registers.  B_pad=8 keeps every slice sublane-aligned.
        for t in range(S):
            xw_t = xw[t * B_pad:(t + 1) * B_pad, :]                  # (B_pad, H)
            h0 = jnp.tanh(
                xw_t + jnp.dot(h0, whh0, preferred_element_type=jnp.float32))
            # Layer 1: one fused dot instead of two dots + add.
            h01 = jnp.concatenate([h0, h1], axis=-1)                 # (B_pad, 2H)
            h1 = jnp.tanh(
                jnp.dot(h01, w_l1, preferred_element_type=jnp.float32) + b1)

        # fc(out[:, -1, :]); padded lanes of wfc/bfc are zero.
        out_ref[...] = (
            jnp.dot(h1, wfc, preferred_element_type=jnp.float32)
            + bfc).astype(out_ref.dtype)

    return kernel


def prepare_params(params):
    """One-time packing of weights/biases into two kernel-ready slabs.

    Done ONCE, outside the per-call forward, so no transpose/concat/stack HLOs
    run on the forward path.
    """
    I = params["w_ih0"].shape[1]
    H = params["w_hh0"].shape[0]
    O = params["w_fc"].shape[0]
    assert O <= H, "packing assumes output_size <= hidden_size"

    wih0 = params["w_ih0"].T                                           # (I, H)
    whh0 = params["w_hh0"].T                                           # (H, H)
    w_l1 = jnp.concatenate([params["w_ih1"].T, params["w_hh1"].T], 0)  # (2H, H)
    wfc_pad = jnp.zeros((H, H), jnp.float32).at[:, :O].set(params["w_fc"].T)
    w_slab = jnp.concatenate([wih0, whh0, w_l1, wfc_pad],
                             axis=0).astype(jnp.float32)               # (I+4H, H)

    b0 = params["b_ih0"] + params["b_hh0"]
    b1 = params["b_ih1"] + params["b_hh1"]
    bfc_pad = jnp.zeros((H,), jnp.float32).at[:O].set(params["b_fc"])
    b_slab = jnp.stack([b0, b1, bfc_pad], axis=0).astype(jnp.float32)  # (3, H)

    return w_slab, b_slab, O


def rnn_model_forward(x, w_slab, b_slab, *, output_size):
    """x: (batch, seq, input_size) f32. Returns (batch, output_size) f32."""
    B, S, I = x.shape
    H = w_slab.shape[1]
    assert w_slab.shape[0] == I + 4 * H

    # Pad the batch to a full f32 sublane group (multiple of 8).
    B_pad = max(8, ((B + 7) // 8) * 8)
    x_t = jnp.transpose(x, (1, 0, 2))                    # (S, B, I) seq-major
    if B_pad != B:
        x_t = jnp.pad(x_t, ((0, 0), (0, B_pad - B), (0, 0)))
    x2d = x_t.reshape(S * B_pad, I)                      # rows t*B_pad:(t+1)*B_pad = step t

    flops = 2 * (S * B_pad * I * H          # hoisted layer-0 projection
                 + S * B_pad * H * H        # h0 @ whh0 per step
                 + S * B_pad * 2 * H * H    # fused layer-1 dot per step
                 + B_pad * H * H)           # final fc (padded width)
    transcendentals = 2 * S * B_pad * H     # two tanh per step
    bytes_accessed = 4 * (S * B_pad * I + w_slab.size + b_slab.size + B_pad * H)

    vmem = pl.BlockSpec(memory_space=pltpu.MemorySpace.VMEM)
    out_pad = pl.pallas_call(
        _make_rnn_kernel(S, B_pad, I, H),
        out_shape=jax.ShapeDtypeStruct((B_pad, H), jnp.float32),
        in_specs=[vmem, vmem, vmem],
        out_specs=vmem,
        cost_estimate=pl.CostEstimate(flops=flops,
                                      transcendentals=transcendentals,
                                      bytes_accessed=bytes_accessed),
    )(x2d, w_slab, b_slab)

    # Drop padded batch rows and padded output lanes OUTSIDE the kernel.
    return out_pad[:B, :output_size]


def _reference_forward(x, params):
    """Pure-JAX reference matching torch.nn.RNN(num_layers=2, batch_first=True) + Linear."""
    B, S, I = x.shape
    H = params["w_hh0"].shape[0]
    h0 = jnp.zeros((B, H), jnp.float32)
    h1 = jnp.zeros((B, H), jnp.float32)
    for t in range(S):
        xt = x[:, t, :]
        h0 = jnp.tanh(xt @ params["w_ih0"].T + params["b_ih0"]
                      + h0 @ params["w_hh0"].T + params["b_hh0"])
        h1 = jnp.tanh(h0 @ params["w_ih1"].T + params["b_ih1"]
                      + h1 @ params["w_hh1"].T + params["b_hh1"])
    return h1 @ params["w_fc"].T + params["b_fc"]


def init_params(key, input_size, hidden_size, output_size):
    """Deterministic init mimicking PyTorch's U(-1/sqrt(H), 1/sqrt(H))."""
    ks = jax.random.split(key, 11)
    bound = 1.0 / np.sqrt(hidden_size)
    u = lambda k, shape: jax.random.uniform(k, shape, jnp.float32, -bound, bound)
    return {
        "w_ih0": u(ks[0], (hidden_size, input_size)),
        "w_hh0": u(ks[1], (hidden_size, hidden_size)),
        "b_ih0": u(ks[2], (hidden_size,)),
        "b_hh0": u(ks[3], (hidden_size,)),
        "w_ih1": u(ks[4], (hidden_size, hidden_size)),
        "w_hh1": u(ks[5], (hidden_size, hidden_size)),
        "b_ih1": u(ks[6], (hidden_size,)),
        "b_hh1": u(ks[7], (hidden_size,)),
        "w_fc": u(ks[8], (output_size, hidden_size)),
        "b_fc": u(ks[9], (output_size,)),
    }


if __name__ == "__main__":
    # Small shapes consistent with the module (input_size == output_size == n;
    # the file-loaded adjacency matrix only determines n, so we pick n=16).
    batch, seq = 2, 8
    input_size = 16      # stands in for n (adjacency-matrix size)
    hidden_size = 32
    output_size = 16
    num_layers = 2       # the 2-layer stack is hard-coded in the kernel

    key = jax.random.PRNGKey(0)
    k_x, k_p = jax.random.split(key)
    x = jax.random.normal(k_x, (batch, seq, input_size), jnp.float32)
    params = init_params(k_p, input_size, hidden_size, output_size)

    # One-time packing (NOT on the per-call forward path).
    w_slab, b_slab, O = prepare_params(params)
    w_slab = jax.block_until_ready(w_slab)
    b_slab = jax.block_until_ready(b_slab)

    forward = jax.jit(rnn_model_forward, static_argnames=("output_size",))
    out = forward(x, w_slab, b_slab, output_size=O)
    out = jax.block_until_ready(out)

    ref = _reference_forward(x, params)
    np.testing.assert_allclose(np.asarray(out), np.asarray(ref),
                               rtol=1e-5, atol=1e-5)

    print("KERNEL_OK")
</pallas_src>

<mosaic_0001>
module attributes {stable_mosaic.version = 11 : i64} {
  func.func @kernel(%arg0: memref<64x16xf32, #tpu.memory_space<vmem>>, %arg1: memref<144x32xf32, #tpu.memory_space<vmem>>, %arg2: memref<3x32xf32, #tpu.memory_space<vmem>>, %arg3: memref<8x32xf32, #tpu.memory_space<vmem>>) attributes {dimension_semantics = [], scalar_prefetch = 0 : i64, scratch_operands = 0 : i64, tpu.core_type = #tpu.core_type<tc>} {
    %c0 = arith.constant 0 : index
    %c0_0 = arith.constant 0 : index
    %0 = vector.load %arg1[%c0, %c0_0] : memref<144x32xf32, #tpu.memory_space<vmem>>, vector<16x32xf32>
    %c16 = arith.constant 16 : index
    %c0_1 = arith.constant 0 : index
    %1 = vector.load %arg1[%c16, %c0_1] : memref<144x32xf32, #tpu.memory_space<vmem>>, vector<32x32xf32>
    %c48 = arith.constant 48 : index
    %c0_2 = arith.constant 0 : index
    %2 = vector.load %arg1[%c48, %c0_2] : memref<144x32xf32, #tpu.memory_space<vmem>>, vector<64x32xf32>
    %c112 = arith.constant 112 : index
    %c0_3 = arith.constant 0 : index
    %3 = vector.load %arg1[%c112, %c0_3] : memref<144x32xf32, #tpu.memory_space<vmem>>, vector<32x32xf32>
    %c0_4 = arith.constant 0 : index
    %c0_5 = arith.constant 0 : index
    %4 = vector.load %arg2[%c0_4, %c0_5] : memref<3x32xf32, #tpu.memory_space<vmem>>, vector<1x32xf32>
    %c1 = arith.constant 1 : index
    %c0_6 = arith.constant 0 : index
    %5 = vector.load %arg2[%c1, %c0_6] : memref<3x32xf32, #tpu.memory_space<vmem>>, vector<1x32xf32>
    %c2 = arith.constant 2 : index
    %c0_7 = arith.constant 0 : index
    %6 = vector.load %arg2[%c2, %c0_7] : memref<3x32xf32, #tpu.memory_space<vmem>>, vector<1x32xf32>
    %c0_8 = arith.constant 0 : index
    %c0_9 = arith.constant 0 : index
    %7 = vector.load %arg0[%c0_8, %c0_9] : memref<64x16xf32, #tpu.memory_space<vmem>>, vector<64x16xf32>
    %cst = arith.constant dense<0.000000e+00> : vector<64x32xf32>
    %8 = tpu.matmul %7, %0, %cst {dimension_numbers = #tpu.dot_dimension_numbers<[1], [0], [0], [1], [0, 0, 1, 1], [], []>} : vector<64x16xf32>, vector<16x32xf32>, vector<64x32xf32> -> vector<64x32xf32>
    %9 = vector.broadcast %4 : vector<1x32xf32> to vector<64x32xf32>
    %10 = arith.addf %8, %9 : vector<64x32xf32>
    %cst_10 = arith.constant 0.000000e+00 : f32
    %11 = vector.broadcast %cst_10 : f32 to vector<8x32xf32>
    %cst_11 = arith.constant 0.000000e+00 : f32
    %12 = vector.broadcast %cst_11 : f32 to vector<8x32xf32>
    %13 = vector.extract_strided_slice %10 {offsets = [0, 0], sizes = [8, 32], strides = [1, 1]} : vector<64x32xf32> to vector<8x32xf32>
    %cst_12 = arith.constant dense<0.000000e+00> : vector<8x32xf32>
    %14 = tpu.matmul %11, %1, %cst_12 {dimension_numbers = #tpu.dot_dimension_numbers<[1], [0], [0], [1], [0, 0, 1, 1], [], []>} : vector<8x32xf32>, vector<32x32xf32>, vector<8x32xf32> -> vector<8x32xf32>
    %15 = arith.addf %13, %14 : vector<8x32xf32>
    %16 = math.tanh %15 : vector<8x32xf32>
    %17 = tpu.concatenate %16, %12 in 1 : vector<8x32xf32>, vector<8x32xf32> -> vector<8x64xf32>
    %cst_13 = arith.constant dense<0.000000e+00> : vector<8x32xf32>
    %18 = tpu.matmul %17, %2, %cst_13 {dimension_numbers = #tpu.dot_dimension_numbers<[1], [0], [0], [1], [0, 0, 1, 1], [], []>} : vector<8x64xf32>, vector<64x32xf32>, vector<8x32xf32> -> vector<8x32xf32>
    %19 = vector.broadcast %5 : vector<1x32xf32> to vector<8x32xf32>
    %20 = arith.addf %18, %19 : vector<8x32xf32>
    %21 = math.tanh %20 : vector<8x32xf32>
    %22 = vector.extract_strided_slice %10 {offsets = [8, 0], sizes = [8, 32], strides = [1, 1]} : vector<64x32xf32> to vector<8x32xf32>
    %cst_14 = arith.constant dense<0.000000e+00> : vector<8x32xf32>
    %23 = tpu.matmul %16, %1, %cst_14 {dimension_numbers = #tpu.dot_dimension_numbers<[1], [0], [0], [1], [0, 0, 1, 1], [], []>} : vector<8x32xf32>, vector<32x32xf32>, vector<8x32xf32> -> vector<8x32xf32>
    %24 = arith.addf %22, %23 : vector<8x32xf32>
    %25 = math.tanh %24 : vector<8x32xf32>
    %26 = tpu.concatenate %25, %21 in 1 : vector<8x32xf32>, vector<8x32xf32> -> vector<8x64xf32>
    %cst_15 = arith.constant dense<0.000000e+00> : vector<8x32xf32>
    %27 = tpu.matmul %26, %2, %cst_15 {dimension_numbers = #tpu.dot_dimension_numbers<[1], [0], [0], [1], [0, 0, 1, 1], [], []>} : vector<8x64xf32>, vector<64x32xf32>, vector<8x32xf32> -> vector<8x32xf32>
    %28 = vector.broadcast %5 : vector<1x32xf32> to vector<8x32xf32>
    %29 = arith.addf %27, %28 : vector<8x32xf32>
    %30 = math.tanh %29 : vector<8x32xf32>
    %31 = vector.extract_strided_slice %10 {offsets = [16, 0], sizes = [8, 32], strides = [1, 1]} : vector<64x32xf32> to vector<8x32xf32>
    %cst_16 = arith.constant dense<0.000000e+00> : vector<8x32xf32>
    %32 = tpu.matmul %25, %1, %cst_16 {dimension_numbers = #tpu.dot_dimension_numbers<[1], [0], [0], [1], [0, 0, 1, 1], [], []>} : vector<8x32xf32>, vector<32x32xf32>, vector<8x32xf32> -> vector<8x32xf32>
    %33 = arith.addf %31, %32 : vector<8x32xf32>
    %34 = math.tanh %33 : vector<8x32xf32>
    %35 = tpu.concatenate %34, %30 in 1 : vector<8x32xf32>, vector<8x32xf32> -> vector<8x64xf32>
    %cst_17 = arith.constant dense<0.000000e+00> : vector<8x32xf32>
    %36 = tpu.matmul %35, %2, %cst_17 {dimension_numbers = #tpu.dot_dimension_numbers<[1], [0], [0], [1], [0, 0, 1, 1], [], []>} : vector<8x64xf32>, vector<64x32xf32>, vector<8x32xf32> -> vector<8x32xf32>
    %37 = vector.broadcast %5 : vector<1x32xf32> to vector<8x32xf32>
    %38 = arith.addf %36, %37 : vector<8x32xf32>
    %39 = math.tanh %38 : vector<8x32xf32>
    %40 = vector.extract_strided_slice %10 {offsets = [24, 0], sizes = [8, 32], strides = [1, 1]} : vector<64x32xf32> to vector<8x32xf32>
    %cst_18 = arith.constant dense<0.000000e+00> : vector<8x32xf32>
    %41 = tpu.matmul %34, %1, %cst_18 {dimension_numbers = #tpu.dot_dimension_numbers<[1], [0], [0], [1], [0, 0, 1, 1], [], []>} : vector<8x32xf32>, vector<32x32xf32>, vector<8x32xf32> -> vector<8x32xf32>
    %42 = arith.addf %40, %41 : vector<8x32xf32>
    %43 = math.tanh %42 : vector<8x32xf32>
    %44 = tpu.concatenate %43, %39 in 1 : vector<8x32xf32>, vector<8x32xf32> -> vector<8x64xf32>
    %cst_19 = arith.constant dense<0.000000e+00> : vector<8x32xf32>
    %45 = tpu.matmul %44, %2, %cst_19 {dimension_numbers = #tpu.dot_dimension_numbers<[1], [0], [0], [1], [0, 0, 1, 1], [], []>} : vector<8x64xf32>, vector<64x32xf32>, vector<8x32xf32> -> vector<8x32xf32>
    %46 = vector.broadcast %5 : vector<1x32xf32> to vector<8x32xf32>
    %47 = arith.addf %45, %46 : vector<8x32xf32>
    %48 = math.tanh %47 : vector<8x32xf32>
    %49 = vector.extract_strided_slice %10 {offsets = [32, 0], sizes = [8, 32], strides = [1, 1]} : vector<64x32xf32> to vector<8x32xf32>
    %cst_20 = arith.constant dense<0.000000e+00> : vector<8x32xf32>
    %50 = tpu.matmul %43, %1, %cst_20 {dimension_numbers = #tpu.dot_dimension_numbers<[1], [0], [0], [1], [0, 0, 1, 1], [], []>} : vector<8x32xf32>, vector<32x32xf32>, vector<8x32xf32> -> vector<8x32xf32>
    %51 = arith.addf %49, %50 : vector<8x32xf32>
    %52 = math.tanh %51 : vector<8x32xf32>
    %53 = tpu.concatenate %52, %48 in 1 : vector<8x32xf32>, vector<8x32xf32> -> vector<8x64xf32>
    %cst_21 = arith.constant dense<0.000000e+00> : vector<8x32xf32>
    %54 = tpu.matmul %53, %2, %cst_21 {dimension_numbers = #tpu.dot_dimension_numbers<[1], [0], [0], [1], [0, 0, 1, 1], [], []>} : vector<8x64xf32>, vector<64x32xf32>, vector<8x32xf32> -> vector<8x32xf32>
    %55 = vector.broadcast %5 : vector<1x32xf32> to vector<8x32xf32>
    %56 = arith.addf %54, %55 : vector<8x32xf32>
    %57 = math.tanh %56 : vector<8x32xf32>
    %58 = vector.extract_strided_slice %10 {offsets = [40, 0], sizes = [8, 32], strides = [1, 1]} : vector<64x32xf32> to vector<8x32xf32>
    %cst_22 = arith.constant dense<0.000000e+00> : vector<8x32xf32>
    %59 = tpu.matmul %52, %1, %cst_22 {dimension_numbers = #tpu.dot_dimension_numbers<[1], [0], [0], [1], [0, 0, 1, 1], [], []>} : vector<8x32xf32>, vector<32x32xf32>, vector<8x32xf32> -> vector<8x32xf32>
    %60 = arith.addf %58, %59 : vector<8x32xf32>
    %61 = math.tanh %60 : vector<8x32xf32>
    %62 = tpu.concatenate %61, %57 in 1 : vector<8x32xf32>, vector<8x32xf32> -> vector<8x64xf32>
    %cst_23 = arith.constant dense<0.000000e+00> : vector<8x32xf32>
    %63 = tpu.matmul %62, %2, %cst_23 {dimension_numbers = #tpu.dot_dimension_numbers<[1], [0], [0], [1], [0, 0, 1, 1], [], []>} : vector<8x64xf32>, vector<64x32xf32>, vector<8x32xf32> -> vector<8x32xf32>
    %64 = vector.broadcast %5 : vector<1x32xf32> to vector<8x32xf32>
    %65 = arith.addf %63, %64 : vector<8x32xf32>
    %66 = math.tanh %65 : vector<8x32xf32>
    %67 = vector.extract_strided_slice %10 {offsets = [48, 0], sizes = [8, 32], strides = [1, 1]} : vector<64x32xf32> to vector<8x32xf32>
    %cst_24 = arith.constant dense<0.000000e+00> : vector<8x32xf32>
    %68 = tpu.matmul %61, %1, %cst_24 {dimension_numbers = #tpu.dot_dimension_numbers<[1], [0], [0], [1], [0, 0, 1, 1], [], []>} : vector<8x32xf32>, vector<32x32xf32>, vector<8x32xf32> -> vector<8x32xf32>
    %69 = arith.addf %67, %68 : vector<8x32xf32>
    %70 = math.tanh %69 : vector<8x32xf32>
    %71 = tpu.concatenate %70, %66 in 1 : vector<8x32xf32>, vector<8x32xf32> -> vector<8x64xf32>
    %cst_25 = arith.constant dense<0.000000e+00> : vector<8x32xf32>
    %72 = tpu.matmul %71, %2, %cst_25 {dimension_numbers = #tpu.dot_dimension_numbers<[1], [0], [0], [1], [0, 0, 1, 1], [], []>} : vector<8x64xf32>, vector<64x32xf32>, vector<8x32xf32> -> vector<8x32xf32>
    %73 = vector.broadcast %5 : vector<1x32xf32> to vector<8x32xf32>
    %74 = arith.addf %72, %73 : vector<8x32xf32>
    %75 = math.tanh %74 : vector<8x32xf32>
    %76 = vector.extract_strided_slice %10 {offsets = [56, 0], sizes = [8, 32], strides = [1, 1]} : vector<64x32xf32> to vector<8x32xf32>
    %cst_26 = arith.constant dense<0.000000e+00> : vector<8x32xf32>
    %77 = tpu.matmul %70, %1, %cst_26 {dimension_numbers = #tpu.dot_dimension_numbers<[1], [0], [0], [1], [0, 0, 1, 1], [], []>} : vector<8x32xf32>, vector<32x32xf32>, vector<8x32xf32> -> vector<8x32xf32>
    %78 = arith.addf %76, %77 : vector<8x32xf32>
    %79 = math.tanh %78 : vector<8x32xf32>
    %80 = tpu.concatenate %79, %75 in 1 : vector<8x32xf32>, vector<8x32xf32> -> vector<8x64xf32>
    %cst_27 = arith.constant dense<0.000000e+00> : vector<8x32xf32>
    %81 = tpu.matmul %80, %2, %cst_27 {dimension_numbers = #tpu.dot_dimension_numbers<[1], [0], [0], [1], [0, 0, 1, 1], [], []>} : vector<8x64xf32>, vector<64x32xf32>, vector<8x32xf32> -> vector<8x32xf32>
    %82 = vector.broadcast %5 : vector<1x32xf32> to vector<8x32xf32>
    %83 = arith.addf %81, %82 : vector<8x32xf32>
    %84 = math.tanh %83 : vector<8x32xf32>
    %cst_28 = arith.constant dense<0.000000e+00> : vector<8x32xf32>
    %85 = tpu.matmul %84, %3, %cst_28 {dimension_numbers = #tpu.dot_dimension_numbers<[1], [0], [0], [1], [0, 0, 1, 1], [], []>} : vector<8x32xf32>, vector<32x32xf32>, vector<8x32xf32> -> vector<8x32xf32>
    %86 = vector.broadcast %6 : vector<1x32xf32> to vector<8x32xf32>
    %87 = arith.addf %85, %86 : vector<8x32xf32>
    %c0_29 = arith.constant 0 : index
    %c0_30 = arith.constant 0 : index
    %88 = vector.load %arg3[%c0_29, %c0_30] : memref<8x32xf32, #tpu.memory_space<vmem>>, vector<8x32xf32>
    tpu.vector_store %arg3[%c0_29, %c0_30], %87 {strides = array<i32>} : memref<8x32xf32, #tpu.memory_space<vmem>>, vector<8x32xf32>,
    return
  }
}

</mosaic_0001>

<llo_original>
// kernel: rnn_model_forward.1
$region0: #{rnn_model_forward.1}
  #allocation0 [shape = 'u32[]', space=smem, size = 0x4, offset = 0x4, fixed_abs, tag = 'smem constant byte address 0x4 - core index']
  #allocation1 [shape = 'u32[144,128]{1,0:T(1,128)}', space=vmem, size = 0x12000, scoped, tag = 'internal scratch']
  %s0 = inlined_call_operand.vmem [shape: f32[64,16], index: 0, kind: input, shape index: {}]
  %s1 = inlined_call_operand.vmem [shape: f32[144,32], index: 1, kind: input, shape index: {}]
  %s2 = inlined_call_operand.vmem [shape: f32[3,32], index: 2, kind: input, shape index: {}]
  %s3 = inlined_call_operand.vmem [shape: f32[8,32], index: 3, kind: output, shape index: {}]
  %s4 = sld [smem:[#allocation0]]
  $region22: #{rnn_model_forward.1} parent=0
    _
  %s6 = ssub.s32 1, %s4
  %s7 = scalar_select 0, %s6, %s4
  // Predicated region
  $region2: #{rnn_model_forward.1} parent=0 // pred_check
    _
  $region3: #{rnn_model_forward.1} parent=0 // pred_check_branch
    %9 = sbr.rel (0) target = $region5
  $region4: #{rnn_model_forward.1} parent=0 // pred_region
    _
  $region5: #{rnn_model_forward.1} parent=0 // pred_fallthru
    _
  // Predicated region
  $region6: #{rnn_model_forward.1} parent=0 // pred_check
    _
  $region7: #{rnn_model_forward.1} parent=0 // pred_check_branch
    %11 = sbr.rel (0) target = $region9
  $region8: #{rnn_model_forward.1} parent=0 // pred_region
    _
  $region9: #{rnn_model_forward.1} parent=0 // pred_fallthru
    _
  // Predicated region
  $region10: #{rnn_model_forward.1} parent=0 // pred_check
    _
  $region11: #{rnn_model_forward.1} parent=0 // pred_check_branch
    %13 = sbr.rel (0) target = $region13
  $region12: #{rnn_model_forward.1} parent=0 // pred_region
    _
  $region13: #{rnn_model_forward.1} parent=0 // pred_fallthru
    _
  %v14 = vld [vmem:[%s1] sm:$0xff]
  %v15 = vld [vmem:[%s1 + $0x8] sm:$0xff]
  %v16 = vld [vmem:[%s1 + $0x10] sm:$0xff]
  %v17 = vld [vmem:[%s1 + $0x18] sm:$0xff]
  %v18 = vld [vmem:[%s1 + $0x20] sm:$0xff]
  %v19 = vld [vmem:[%s1 + $0x28] sm:$0xff]
  %v20 = vld [vmem:[%s1 + $0x30] sm:$0xff]
  %v21 = vld [vmem:[%s1 + $0x38] sm:$0xff]
  %v22 = vld [vmem:[%s1 + $0x40] sm:$0xff]
  %v23 = vld [vmem:[%s1 + $0x48] sm:$0xff]
  %v24 = vld [vmem:[%s1 + $0x50] sm:$0xff]
  %v25 = vld [vmem:[%s1 + $0x58] sm:$0xff]
  %v26 = vld [vmem:[%s1 + $0x60] sm:$0xff]
  %v27 = vld [vmem:[%s1 + $0x68] sm:$0xff]
  %v28 = vld [vmem:[%s1 + $0x70] sm:$0xff]
  %v29 = vld [vmem:[%s1 + $0x78] sm:$0xff]
  %v30 = vld [vmem:[%s1 + $0x80] sm:$0xff]
  %v31 = vld [vmem:[%s1 + $0x88] sm:$0xff]
  %v32 = vld [vmem:[%s2] sm:$0x1]
  %v33 = vld [vmem:[%s2 + $0x1] sm:$0x1]
  %v34 = vld [vmem:[%s2 + $0x2] sm:$0x1]
  %v35 = vld [vmem:[%s0] sm:$0xff]
  %v36 = vld [vmem:[%s0 + $0x8] sm:$0xff]
  %v37 = vld [vmem:[%s0 + $0x10] sm:$0xff]
  %v38 = vld [vmem:[%s0 + $0x18] sm:$0xff]
  %v39 = vld [vmem:[%s0 + $0x20] sm:$0xff]
  %v40 = vld [vmem:[%s0 + $0x28] sm:$0xff]
  %v41 = vld [vmem:[%s0 + $0x30] sm:$0xff]
  %v42 = vld [vmem:[%s0 + $0x38] sm:$0xff]
  %v43 = vlaneseq
  %v44 = vshrl.u32 %v43, 7
  %v45 = vsub.s32 0, %v44
  %v46 = vrot.slane %v32, %v45
  %vm47 = vcmask 130048
  %v49 = vsel %vm47, %v35, 0
  %v52 = vsel %vm47, %v36, 0
  %v55 = vsel %vm47, %v37, 0
  %v58 = vsel %vm47, %v38, 0
  %v61 = vsel %vm47, %v39, 0
  %v64 = vsel %vm47, %v40, 0
  %v67 = vsel %vm47, %v41, 0
  %v70 = vsel %vm47, %v42, 0
  %72 = vmatprep.subr.mxu0 0.0
  %73 = vmatpush1.msra.mxu0 %v14
  %74 = vmatprep.subr.mxu0 0.0
  %75 = vmatpush1.msra.mxu0 %v15
  %76 = vmatprep.subr.mxu0 0.0
  %77 = vmatpush1.msra.mxu0 0.0
  %78 = vmatprep.subr.mxu0 0.0
  %79 = vmatpush1.msra.mxu0 0.0
  %80 = vmatprep.subr.mxu0 0.0
  %81 = vmatpush1.msra.mxu0 0.0
  %82 = vmatprep.subr.mxu0 0.0
  %83 = vmatpush1.msra.mxu0 0.0
  %84 = vmatprep.subr.mxu0 0.0
  %85 = vmatpush1.msra.mxu0 0.0
  %86 = vmatprep.subr.mxu0 0.0
  %87 = vmatpush1.msra.mxu0 0.0
  %88 = vmatprep.subr.mxu0 0.0
  %89 = vmatpush1.msra.mxu0 0.0
  %90 = vmatprep.subr.mxu0 0.0
  %91 = vmatpush1.msra.mxu0 0.0
  %92 = vmatprep.subr.mxu0 0.0
  %93 = vmatpush1.msra.mxu0 0.0
  %94 = vmatprep.subr.mxu0 0.0
  %95 = vmatpush1.msra.mxu0 0.0
  %96 = vmatprep.subr.mxu0 0.0
  %97 = vmatpush1.msra.mxu0 0.0
  %98 = vmatprep.subr.mxu0 0.0
  %99 = vmatpush1.msra.mxu0 0.0
  %100 = vmatprep.subr.mxu0 0.0
  %101 = vmatpush1.msra.mxu0 0.0
  %102 = vmatprep.subr.mxu0 0.0
  %103 = vmatpush1.msra.mxu0 0.0
  %104 = vmatprep.subr.mxu0 0.0
  %105 = vmatpush1.msra.mxu0 0.0
  %106 = vmatprep.subr.mxu0 0.0
  %107 = vmatpush1.msra.mxu0 0.0
  %108 = vmatprep.subr.mxu0 0.0
  %109 = vmatpush1.msra.mxu0 0.0
  %110 = vmatprep.subr.mxu0 0.0
  %111 = vmatpush1.msra.mxu0 0.0
  %112 = vmatprep.subr.mxu0 0.0
  %113 = vmatpush1.msra.mxu0 0.0
  %114 = vmatprep.subr.mxu0 0.0
  %115 = vmatpush1.msra.mxu0 0.0
  %116 = vmatprep.subr.mxu0 0.0
  %117 = vmatpush1.msra.mxu0 0.0
  %118 = vmatprep.subr.mxu0 0.0
  %119 = vmatpush1.msra.mxu0 0.0
  %120 = vmatprep.subr.mxu0 0.0
  %121 = vmatpush1.msra.mxu0 0.0
  %122 = vmatprep.subr.mxu0 0.0
  %123 = vmatpush1.msra.mxu0 0.0
  %124 = vmatprep.subr.mxu0 0.0
  %125 = vmatpush1.msra.mxu0 0.0
  %126 = vmatprep.subr.mxu0 0.0
  %127 = vmatpush1.msra.mxu0 0.0
  %128 = vmatprep.subr.mxu0 0.0
  %129 = vmatpush1.msra.mxu0 0.0
  %130 = vmatprep.subr.mxu0 0.0
  %131 = vmatpush1.msra.mxu0 0.0
  %132 = vmatprep.subr.mxu0 0.0
  %133 = vmatpush1.msra.mxu0 0.0
  %134 = vmatprep.subr.mxu0 0.0
  %135 = vmatpush1.msra.mxu0 0.0
  %136 = vmatprep.mubr.f32.mxu0 0.0
  %137 = vmatmul.mubr.f32.gmra.mrb[0].mxu0 %v49
  %v138 = vpop.f32.mrb[0].mxu0
  %v139 = vadd.f32 %v46, %v138
  %v140 = vpop.f32.mrb[0].mxu0
  %141 = vmatprep.mubr.f32.mxu0 0.0
  %142 = vmatmul.mubr.f32.gmra.mrb[0].mxu0 %v52
  %v143 = vpop.f32.mrb[0].mxu0
  %v144 = vadd.f32 %v46, %v143
  %v145 = vpop.f32.mrb[0].mxu0
  %146 = vmatprep.mubr.f32.mxu0 0.0
  %147 = vmatmul.mubr.f32.gmra.mrb[0].mxu0 %v55
  %v148 = vpop.f32.mrb[0].mxu0
  %v149 = vadd.f32 %v46, %v148
  %v150 = vpop.f32.mrb[0].mxu0
  %151 = vmatprep.mubr.f32.mxu0 0.0
  %152 = vmatmul.mubr.f32.gmra.mrb[0].mxu0 %v58
  %v153 = vpop.f32.mrb[0].mxu0
  %v154 = vadd.f32 %v46, %v153
  %v155 = vpop.f32.mrb[0].mxu0
  %156 = vmatprep.mubr.f32.mxu0 0.0
  %157 = vmatmul.mubr.f32.gmra.mrb[0].mxu0 %v61
  %v158 = vpop.f32.mrb[0].mxu0
  %v159 = vadd.f32 %v46, %v158
  %v160 = vpop.f32.mrb[0].mxu0
  %161 = vmatprep.mubr.f32.mxu0 0.0
  %162 = vmatmul.mubr.f32.gmra.mrb[0].mxu0 %v64
  %v163 = vpop.f32.mrb[0].mxu0
  %v164 = vadd.f32 %v46, %v163
  %v165 = vpop.f32.mrb[0].mxu0
  %166 = vmatprep.mubr.f32.mxu0 0.0
  %167 = vmatmul.mubr.f32.gmra.mrb[0].mxu0 %v67
  %v168 = vpop.f32.mrb[0].mxu0
  %v169 = vadd.f32 %v46, %v168
  %v170 = vpop.f32.mrb[0].mxu0
  %171 = vmatprep.mubr.f32.mxu0 0.0
  %172 = vmatmul.mubr.f32.gmra.mrb[0].mxu0 %v70
  %v173 = vpop.f32.mrb[0].mxu0
  %v174 = vadd.f32 %v46, %v173
  %v175 = vpop.f32.mrb[0].mxu0
  %176 = vdwg.mxu0
  %vm177 = vcmask 261120
  %v179 = vsel %vm177, 0.0, 0
  %181 = vmatprep.subr.mxu0 0.0
  %182 = vmatpush1.msra.mxu0 %v16
  %183 = vmatprep.subr.mxu0 0.0
  %184 = vmatpush1.msra.mxu0 %v17
  %185 = vmatprep.subr.mxu0 0.0
  %186 = vmatpush1.msra.mxu0 %v18
  %187 = vmatprep.subr.mxu0 0.0
  %188 = vmatpush1.msra.mxu0 %v19
  %189 = vmatprep.subr.mxu0 0.0
  %190 = vmatpush1.msra.mxu0 0.0
  %191 = vmatprep.subr.mxu0 0.0
  %192 = vmatpush1.msra.mxu0 0.0
  %193 = vmatprep.subr.mxu0 0.0
  %194 = vmatpush1.msra.mxu0 0.0
  %195 = vmatprep.subr.mxu0 0.0
  %196 = vmatpush1.msra.mxu0 0.0
  %197 = vmatprep.subr.mxu0 0.0
  %198 = vmatpush1.msra.mxu0 0.0
  %199 = vmatprep.subr.mxu0 0.0
  %200 = vmatpush1.msra.mxu0 0.0
  %201 = vmatprep.subr.mxu0 0.0
  %202 = vmatpush1.msra.mxu0 0.0
  %203 = vmatprep.subr.mxu0 0.0
  %204 = vmatpush1.msra.mxu0 0.0
  %205 = vmatprep.subr.mxu0 0.0
  %206 = vmatpush1.msra.mxu0 0.0
  %207 = vmatprep.subr.mxu0 0.0
  %208 = vmatpush1.msra.mxu0 0.0
  %209 = vmatprep.subr.mxu0 0.0
  %210 = vmatpush1.msra.mxu0 0.0
  %211 = vmatprep.subr.mxu0 0.0
  %212 = vmatpush1.msra.mxu0 0.0
  %213 = vmatprep.subr.mxu0 0.0
  %214 = vmatpush1.msra.mxu0 0.0
  %215 = vmatprep.subr.mxu0 0.0
  %216 = vmatpush1.msra.mxu0 0.0
  %217 = vmatprep.subr.mxu0 0.0
  %218 = vmatpush1.msra.mxu0 0.0
  %219 = vmatprep.subr.mxu0 0.0
  %220 = vmatpush1.msra.mxu0 0.0
  %221 = vmatprep.subr.mxu0 0.0
  %222 = vmatpush1.msra.mxu0 0.0
  %223 = vmatprep.subr.mxu0 0.0
  %224 = vmatpush1.msra.mxu0 0.0
  %225 = vmatprep.subr.mxu0 0.0
  %226 = vmatpush1.msra.mxu0 0.0
  %227 = vmatprep.subr.mxu0 0.0
  %228 = vmatpush1.msra.mxu0 0.0
  %229 = vmatprep.subr.mxu0 0.0
  %230 = vmatpush1.msra.mxu0 0.0
  %231 = vmatprep.subr.mxu0 0.0
  %232 = vmatpush1.msra.mxu0 0.0
  %233 = vmatprep.subr.mxu0 0.0
  %234 = vmatpush1.msra.mxu0 0.0
  %235 = vmatprep.subr.mxu0 0.0
  %236 = vmatpush1.msra.mxu0 0.0
  %237 = vmatprep.subr.mxu0 0.0
  %238 = vmatpush1.msra.mxu0 0.0
  %239 = vmatprep.subr.mxu0 0.0
  %240 = vmatpush1.msra.mxu0 0.0
  %241 = vmatprep.subr.mxu0 0.0
  %242 = vmatpush1.msra.mxu0 0.0
  %243 = vmatprep.subr.mxu0 0.0
  %244 = vmatpush1.msra.mxu0 0.0
  %245 = vmatprep.mubr.f32.mxu0 0.0
  %246 = vmatmul.mubr.f32.gmra.mrb[0].mxu0 %v179
  %v247 = vpop.f32.mrb[0].mxu0
  %v248 = vadd.f32 0.0, %v247
  %v249 = vpop.f32.mrb[0].mxu0
  %250 = vdwg.mxu0
  %v251 = vadd.f32 %v139, %v248
  %v252 = vtanh.pop %v251
  %v253 = vsel %vm177, %v252, 0.0
  %v254 = vlaneseq
  %v255 = vshrl.u32 %v254, 7
  %v256 = vsub.s32 0, %v255
  %v257 = vrot.slane %v33, %v256
  %vm258 = vcmask 523264
  %v260 = vsel %vm258, %v253, 0
  %262 = vmatprep.subr.mxu0 0.0
  %263 = vmatpush1.msra.mxu0 %v20
  %264 = vmatprep.subr.mxu0 0.0
  %265 = vmatpush1.msra.mxu0 %v21
  %266 = vmatprep.subr.mxu0 0.0
  %267 = vmatpush1.msra.mxu0 %v22
  %268 = vmatprep.subr.mxu0 0.0
  %269 = vmatpush1.msra.mxu0 %v23
  %270 = vmatprep.subr.mxu0 0.0
  %271 = vmatpush1.msra.mxu0 %v24
  %272 = vmatprep.subr.mxu0 0.0
  %273 = vmatpush1.msra.mxu0 %v25
  %274 = vmatprep.subr.mxu0 0.0
  %275 = vmatpush1.msra.mxu0 %v26
  %276 = vmatprep.subr.mxu0 0.0
  %277 = vmatpush1.msra.mxu0 %v27
  %278 = vmatprep.subr.mxu0 0.0
  %279 = vmatpush1.msra.mxu0 0.0
  %280 = vmatprep.subr.mxu0 0.0
  %281 = vmatpush1.msra.mxu0 0.0
  %282 = vmatprep.subr.mxu0 0.0
  %283 = vmatpush1.msra.mxu0 0.0
  %284 = vmatprep.subr.mxu0 0.0
  %285 = vmatpush1.msra.mxu0 0.0
  %286 = vmatprep.subr.mxu0 0.0
  %287 = vmatpush1.msra.mxu0 0.0
  %288 = vmatprep.subr.mxu0 0.0
  %289 = vmatpush1.msra.mxu0 0.0
  %290 = vmatprep.subr.mxu0 0.0
  %291 = vmatpush1.msra.mxu0 0.0
  %292 = vmatprep.subr.mxu0 0.0
  %293 = vmatpush1.msra.mxu0 0.0
  %294 = vmatprep.subr.mxu0 0.0
  %295 = vmatpush1.msra.mxu0 0.0
  %296 = vmatprep.subr.mxu0 0.0
  %297 = vmatpush1.msra.mxu0 0.0
  %298 = vmatprep.subr.mxu0 0.0
  %299 = vmatpush1.msra.mxu0 0.0
  %300 = vmatprep.subr.mxu0 0.0
  %301 = vmatpush1.msra.mxu0 0.0
  %302 = vmatprep.subr.mxu0 0.0
  %303 = vmatpush1.msra.mxu0 0.0
  %304 = vmatprep.subr.mxu0 0.0
  %305 = vmatpush1.msra.mxu0 0.0
  %306 = vmatprep.subr.mxu0 0.0
  %307 = vmatpush1.msra.mxu0 0.0
  %308 = vmatprep.subr.mxu0 0.0
  %309 = vmatpush1.msra.mxu0 0.0
  %310 = vmatprep.subr.mxu0 0.0
  %311 = vmatpush1.msra.mxu0 0.0
  %312 = vmatprep.subr.mxu0 0.0
  %313 = vmatpush1.msra.mxu0 0.0
  %314 = vmatprep.subr.mxu0 0.0
  %315 = vmatpush1.msra.mxu0 0.0
  %316 = vmatprep.subr.mxu0 0.0
  %317 = vmatpush1.msra.mxu0 0.0
  %318 = vmatprep.subr.mxu0 0.0
  %319 = vmatpush1.msra.mxu0 0.0
  %320 = vmatprep.subr.mxu0 0.0
  %321 = vmatpush1.msra.mxu0 0.0
  %322 = vmatprep.subr.mxu0 0.0
  %323 = vmatpush1.msra.mxu0 0.0
  %324 = vmatprep.subr.mxu0 0.0
  %325 = vmatpush1.msra.mxu0 0.0
  %326 = vmatprep.mubr.f32.mxu0 0.0
  %327 = vmatmul.mubr.f32.gmra.mrb[0].mxu0 %v260
  %v328 = vpop.f32.mrb[0].mxu0
  %v329 = vadd.f32 %v257, %v328
  %v330 = vpop.f32.mrb[0].mxu0
  %331 = vdwg.mxu0
  %v332 = vtanh.pop %v329
  %v334 = vsel %vm177, %v252, 0
  %336 = vmatprep.subr.mxu0 0.0
  %337 = vmatpush1.msra.mxu0 %v16
  %338 = vmatprep.subr.mxu0 0.0
  %339 = vmatpush1.msra.mxu0 %v17
  %340 = vmatprep.subr.mxu0 0.0
  %341 = vmatpush1.msra.mxu0 %v18
  %342 = vmatprep.subr.mxu0 0.0
  %343 = vmatpush1.msra.mxu0 %v19
  %344 = vmatprep.subr.mxu0 0.0
  %345 = vmatpush1.msra.mxu0 0.0
  %346 = vmatprep.subr.mxu0 0.0
  %347 = vmatpush1.msra.mxu0 0.0
  %348 = vmatprep.subr.mxu0 0.0
  %349 = vmatpush1.msra.mxu0 0.0
  %350 = vmatprep.subr.mxu0 0.0
  %351 = vmatpush1.msra.mxu0 0.0
  %352 = vmatprep.subr.mxu0 0.0
  %353 = vmatpush1.msra.mxu0 0.0
  %354 = vmatprep.subr.mxu0 0.0
  %355 = vmatpush1.msra.mxu0 0.0
  %356 = vmatprep.subr.mxu0 0.0
  %357 = vmatpush1.msra.mxu0 0.0
  %358 = vmatprep.subr.mxu0 0.0
  %359 = vmatpush1.msra.mxu0 0.0
  %360 = vmatprep.subr.mxu0 0.0
  %361 = vmatpush1.msra.mxu0 0.0
  %362 = vmatprep.subr.mxu0 0.0
  %363 = vmatpush1.msra.mxu0 0.0
  %364 = vmatprep.subr.mxu0 0.0
  %365 = vmatpush1.msra.mxu0 0.0
  %366 = vmatprep.subr.mxu0 0.0
  %367 = vmatpush1.msra.mxu0 0.0
  %368 = vmatprep.subr.mxu0 0.0
  %369 = vmatpush1.msra.mxu0 0.0
  %370 = vmatprep.subr.mxu0 0.0
  %371 = vmatpush1.msra.mxu0 0.0
  %372 = vmatprep.subr.mxu0 0.0
  %373 = vmatpush1.msra.mxu0 0.0
  %374 = vmatprep.subr.mxu0 0.0
  %375 = vmatpush1.msra.mxu0 0.0
  %376 = vmatprep.subr.mxu0 0.0
  %377 = vmatpush1.msra.mxu0 0.0
  %378 = vmatprep.subr.mxu0 0.0
  %379 = vmatpush1.msra.mxu0 0.0
  %380 = vmatprep.subr.mxu0 0.0
  %381 = vmatpush1.msra.mxu0 0.0
  %382 = vmatprep.subr.mxu0 0.0
  %383 = vmatpush1.msra.mxu0 0.0
  %384 = vmatprep.subr.mxu0 0.0
  %385 = vmatpush1.msra.mxu0 0.0
  %386 = vmatprep.subr.mxu0 0.0
  %387 = vmatpush1.msra.mxu0 0.0
  %388 = vmatprep.subr.mxu0 0.0
  %389 = vmatpush1.msra.mxu0 0.0
  %390 = vmatprep.subr.mxu0 0.0
  %391 = vmatpush1.msra.mxu0 0.0
  %392 = vmatprep.subr.mxu0 0.0
  %393 = vmatpush1.msra.mxu0 0.0
  %394 = vmatprep.subr.mxu0 0.0
  %395 = vmatpush1.msra.mxu0 0.0
  %396 = vmatprep.subr.mxu0 0.0
  %397 = vmatpush1.msra.mxu0 0.0
  %398 = vmatprep.subr.mxu0 0.0
  %399 = vmatpush1.msra.mxu0 0.0
  %400 = vmatprep.mubr.f32.mxu0 0.0
  %401 = vmatmul.mubr.f32.gmra.mrb[0].mxu0 %v334
  %v402 = vpop.f32.mrb[0].mxu0
  %v403 = vadd.f32 0.0, %v402
  %v404 = vpop.f32.mrb[0].mxu0
  %405 = vdwg.mxu0
  %v406 = vadd.f32 %v144, %v403
  %v407 = vtanh.pop %v406
  %409 = vrot.lane.b32.xlu0 %v332, 32
  %v410 = vpop.permute.xlu0 %409
  %v412 = vsel %vm177, %v407, %v410
  %v414 = vsel %vm258, %v412, 0
  %416 = vmatprep.subr.mxu0 0.0
  %417 = vmatpush1.msra.mxu0 %v20
  %418 = vmatprep.subr.mxu0 0.0
  %419 = vmatpush1.msra.mxu0 %v21
  %420 = vmatprep.subr.mxu0 0.0
  %421 = vmatpush1.msra.mxu0 %v22
  %422 = vmatprep.subr.mxu0 0.0
  %423 = vmatpush1.msra.mxu0 %v23
  %424 = vmatprep.subr.mxu0 0.0
  %425 = vmatpush1.msra.mxu0 %v24
  %426 = vmatprep.subr.mxu0 0.0
  %427 = vmatpush1.msra.mxu0 %v25
  %428 = vmatprep.subr.mxu0 0.0
  %429 = vmatpush1.msra.mxu0 %v26
  %430 = vmatprep.subr.mxu0 0.0
  %431 = vmatpush1.msra.mxu0 %v27
  %432 = vmatprep.subr.mxu0 0.0
  %433 = vmatpush1.msra.mxu0 0.0
  %434 = vmatprep.subr.mxu0 0.0
  %435 = vmatpush1.msra.mxu0 0.0
  %436 = vmatprep.subr.mxu0 0.0
  %437 = vmatpush1.msra.mxu0 0.0
  %438 = vmatprep.subr.mxu0 0.0
  %439 = vmatpush1.msra.mxu0 0.0
  %440 = vmatprep.subr.mxu0 0.0
  %441 = vmatpush1.msra.mxu0 0.0
  %442 = vmatprep.subr.mxu0 0.0
  %443 = vmatpush1.msra.mxu0 0.0
  %444 = vmatprep.subr.mxu0 0.0
  %445 = vmatpush1.msra.mxu0 0.0
  %446 = vmatprep.subr.mxu0 0.0
  %447 = vmatpush1.msra.mxu0 0.0
  %448 = vmatprep.subr.mxu0 0.0
  %449 = vmatpush1.msra.mxu0 0.0
  %450 = vmatprep.subr.mxu0 0.0
  %451 = vmatpush1.msra.mxu0 0.0
  %452 = vmatprep.subr.mxu0 0.0
  %453 = vmatpush1.msra.mxu0 0.0
  %454 = vmatprep.subr.mxu0 0.0
  %455 = vmatpush1.msra.mxu0 0.0
  %456 = vmatprep.subr.mxu0 0.0
  %457 = vmatpush1.msra.mxu0 0.0
  %458 = vmatprep.subr.mxu0 0.0
  %459 = vmatpush1.msra.mxu0 0.0
  %460 = vmatprep.subr.mxu0 0.0
  %461 = vmatpush1.msra.mxu0 0.0
  %462 = vmatprep.subr.mxu0 0.0
  %463 = vmatpush1.msra.mxu0 0.0
  %464 = vmatprep.subr.mxu0 0.0
  %465 = vmatpush1.msra.mxu0 0.0
  %466 = vmatprep.subr.mxu0 0.0
  %467 = vmatpush1.msra.mxu0 0.0
  %468 = vmatprep.subr.mxu0 0.0
  %469 = vmatpush1.msra.mxu0 0.0
  %470 = vmatprep.subr.mxu0 0.0
  %471 = vmatpush1.msra.mxu0 0.0
  %472 = vmatprep.subr.mxu0 0.0
  %473 = vmatpush1.msra.mxu0 0.0
  %474 = vmatprep.subr.mxu0 0.0
  %475 = vmatpush1.msra.mxu0 0.0
  %476 = vmatprep.subr.mxu0 0.0
  %477 = vmatpush1.msra.mxu0 0.0
  %478 = vmatprep.subr.mxu0 0.0
  %479 = vmatpush1.msra.mxu0 0.0
  %480 = vmatprep.mubr.f32.mxu0 0.0
  %481 = vmatmul.mubr.f32.gmra.mrb[0].mxu0 %v414
  %v482 = vpop.f32.mrb[0].mxu0
  %v483 = vadd.f32 %v257, %v482
  %v484 = vpop.f32.mrb[0].mxu0
  %485 = vdwg.mxu0
  %v486 = vtanh.pop %v483
  %v488 = vsel %vm177, %v407, 0
  %490 = vmatprep.subr.mxu0 0.0
  %491 = vmatpush1.msra.mxu0 %v16
  %492 = vmatprep.subr.mxu0 0.0
  %493 = vmatpush1.msra.mxu0 %v17
  %494 = vmatprep.subr.mxu0 0.0
  %495 = vmatpush1.msra.mxu0 %v18
  %496 = vmatprep.subr.mxu0 0.0
  %497 = vmatpush1.msra.mxu0 %v19
  %498 = vmatprep.subr.mxu0 0.0
  %499 = vmatpush1.msra.mxu0 0.0
  %500 = vmatprep.subr.mxu0 0.0
  %501 = vmatpush1.msra.mxu0 0.0
  %502 = vmatprep.subr.mxu0 0.0
  %503 = vmatpush1.msra.mxu0 0.0
  %504 = vmatprep.subr.mxu0 0.0
  %505 = vmatpush1.msra.mxu0 0.0
  %506 = vmatprep.subr.mxu0 0.0
  %507 = vmatpush1.msra.mxu0 0.0
  %508 = vmatprep.subr.mxu0 0.0
  %509 = vmatpush1.msra.mxu0 0.0
  %510 = vmatprep.subr.mxu0 0.0
  %511 = vmatpush1.msra.mxu0 0.0
  %512 = vmatprep.subr.mxu0 0.0
  %513 = vmatpush1.msra.mxu0 0.0
  %514 = vmatprep.subr.mxu0 0.0
  %515 = vmatpush1.msra.mxu0 0.0
  %516 = vmatprep.subr.mxu0 0.0
  %517 = vmatpush1.msra.mxu0 0.0
  %518 = vmatprep.subr.mxu0 0.0
  %519 = vmatpush1.msra.mxu0 0.0
  %520 = vmatprep.subr.mxu0 0.0
  %521 = vmatpush1.msra.mxu0 0.0
  %522 = vmatprep.subr.mxu0 0.0
  %523 = vmatpush1.msra.mxu0 0.0
  %524 = vmatprep.subr.mxu0 0.0
  %525 = vmatpush1.msra.mxu0 0.0
  %526 = vmatprep.subr.mxu0 0.0
  %527 = vmatpush1.msra.mxu0 0.0
  %528 = vmatprep.subr.mxu0 0.0
  %529 = vmatpush1.msra.mxu0 0.0
  %530 = vmatprep.subr.mxu0 0.0
  %531 = vmatpush1.msra.mxu0 0.0
  %532 = vmatprep.subr.mxu0 0.0
  %533 = vmatpush1.msra.mxu0 0.0
  %534 = vmatprep.subr.mxu0 0.0
  %535 = vmatpush1.msra.mxu0 0.0
  %536 = vmatprep.subr.mxu0 0.0
  %537 = vmatpush1.msra.mxu0 0.0
  %538 = vmatprep.subr.mxu0 0.0
  %539 = vmatpush1.msra.mxu0 0.0
  %540 = vmatprep.subr.mxu0 0.0
  %541 = vmatpush1.msra.mxu0 0.0
  %542 = vmatprep.subr.mxu0 0.0
  %543 = vmatpush1.msra.mxu0 0.0
  %544 = vmatprep.subr.mxu0 0.0
  %545 = vmatpush1.msra.mxu0 0.0
  %546 = vmatprep.subr.mxu0 0.0
  %547 = vmatpush1.msra.mxu0 0.0
  %548 = vmatprep.subr.mxu0 0.0
  %549 = vmatpush1.msra.mxu0 0.0
  %550 = vmatprep.subr.mxu0 0.0
  %551 = vmatpush1.msra.mxu0 0.0
  %552 = vmatprep.subr.mxu0 0.0
  %553 = vmatpush1.msra.mxu0 0.0
  %554 = vmatprep.mubr.f32.mxu0 0.0
  %555 = vmatmul.mubr.f32.gmra.mrb[0].mxu0 %v488
  %v556 = vpop.f32.mrb[0].mxu0
  %v557 = vadd.f32 0.0, %v556
  %v558 = vpop.f32.mrb[0].mxu0
  %559 = vdwg.mxu0
  %v560 = vadd.f32 %v149, %v557
  %v561 = vtanh.pop %v560
  %563 = vrot.lane.b32.xlu0 %v486, 32
  %v564 = vpop.permute.xlu0 %563
  %v566 = vsel %vm177, %v561, %v564
  %v568 = vsel %vm258, %v566, 0
  %570 = vmatprep.subr.mxu0 0.0
  %571 = vmatpush1.msra.mxu0 %v20
  %572 = vmatprep.subr.mxu0 0.0
  %573 = vmatpush1.msra.mxu0 %v21
  %574 = vmatprep.subr.mxu0 0.0
  %575 = vmatpush1.msra.mxu0 %v22
  %576 = vmatprep.subr.mxu0 0.0
  %577 = vmatpush1.msra.mxu0 %v23
  %578 = vmatprep.subr.mxu0 0.0
  %579 = vmatpush1.msra.mxu0 %v24
  %580 = vmatprep.subr.mxu0 0.0
  %581 = vmatpush1.msra.mxu0 %v25
  %582 = vmatprep.subr.mxu0 0.0
  %583 = vmatpush1.msra.mxu0 %v26
  %584 = vmatprep.subr.mxu0 0.0
  %585 = vmatpush1.msra.mxu0 %v27
  %586 = vmatprep.subr.mxu0 0.0
  %587 = vmatpush1.msra.mxu0 0.0
  %588 = vmatprep.subr.mxu0 0.0
  %589 = vmatpush1.msra.mxu0 0.0
  %590 = vmatprep.subr.mxu0 0.0
  %591 = vmatpush1.msra.mxu0 0.0
  %592 = vmatprep.subr.mxu0 0.0
  %593 = vmatpush1.msra.mxu0 0.0
  %594 = vmatprep.subr.mxu0 0.0
  %595 = vmatpush1.msra.mxu0 0.0
  %596 = vmatprep.subr.mxu0 0.0
  %597 = vmatpush1.msra.mxu0 0.0
  %598 = vmatprep.subr.mxu0 0.0
  %599 = vmatpush1.msra.mxu0 0.0
  %600 = vmatprep.subr.mxu0 0.0
  %601 = vmatpush1.msra.mxu0 0.0
  %602 = vmatprep.subr.mxu0 0.0
  %603 = vmatpush1.msra.mxu0 0.0
  %604 = vmatprep.subr.mxu0 0.0
  %605 = vmatpush1.msra.mxu0 0.0
  %606 = vmatprep.subr.mxu0 0.0
  %607 = vmatpush1.msra.mxu0 0.0
  %608 = vmatprep.subr.mxu0 0.0
  %609 = vmatpush1.msra.mxu0 0.0
  %610 = vmatprep.subr.mxu0 0.0
  %611 = vmatpush1.msra.mxu0 0.0
  %612 = vmatprep.subr.mxu0 0.0
  %613 = vmatpush1.msra.mxu0 0.0
  %614 = vmatprep.subr.mxu0 0.0
  %615 = vmatpush1.msra.mxu0 0.0
  %616 = vmatprep.subr.mxu0 0.0
  %617 = vmatpush1.msra.mxu0 0.0
  %618 = vmatprep.subr.mxu0 0.0
  %619 = vmatpush1.msra.mxu0 0.0
  %620 = vmatprep.subr.mxu0 0.0
  %621 = vmatpush1.msra.mxu0 0.0
  %622 = vmatprep.subr.mxu0 0.0
  %623 = vmatpush1.msra.mxu0 0.0
  %624 = vmatprep.subr.mxu0 0.0
  %625 = vmatpush1.msra.mxu0 0.0
  %626 = vmatprep.subr.mxu0 0.0
  %627 = vmatpush1.msra.mxu0 0.0
  %628 = vmatprep.subr.mxu0 0.0
  %629 = vmatpush1.msra.mxu0 0.0
  %630 = vmatprep.subr.mxu0 0.0
  %631 = vmatpush1.msra.mxu0 0.0
  %632 = vmatprep.subr.mxu0 0.0
  %633 = vmatpush1.msra.mxu0 0.0
  %634 = vmatprep.mubr.f32.mxu0 0.0
  %635 = vmatmul.mubr.f32.gmra.mrb[0].mxu0 %v568
  %v636 = vpop.f32.mrb[0].mxu0
  %v637 = vadd.f32 %v257, %v636
  %v638 = vpop.f32.mrb[0].mxu0
  %639 = vdwg.mxu0
  %v640 = vtanh.pop %v637
  %v642 = vsel %vm177, %v561, 0
  %644 = vmatprep.subr.mxu0 0.0
  %645 = vmatpush1.msra.mxu0 %v16
  %646 = vmatprep.subr.mxu0 0.0
  %647 = vmatpush1.msra.mxu0 %v17
  %648 = vmatprep.subr.mxu0 0.0
  %649 = vmatpush1.msra.mxu0 %v18
  %650 = vmatprep.subr.mxu0 0.0
  %651 = vmatpush1.msra.mxu0 %v19
  %652 = vmatprep.subr.mxu0 0.0
  %653 = vmatpush1.msra.mxu0 0.0
  %654 = vmatprep.subr.mxu0 0.0
  %655 = vmatpush1.msra.mxu0 0.0
  %656 = vmatprep.subr.mxu0 0.0
  %657 = vmatpush1.msra.mxu0 0.0
  %658 = vmatprep.subr.mxu0 0.0
  %659 = vmatpush1.msra.mxu0 0.0
  %660 = vmatprep.subr.mxu0 0.0
  %661 = vmatpush1.msra.mxu0 0.0
  %662 = vmatprep.subr.mxu0 0.0
  %663 = vmatpush1.msra.mxu0 0.0
  %664 = vmatprep.subr.mxu0 0.0
  %665 = vmatpush1.msra.mxu0 0.0
  %666 = vmatprep.subr.mxu0 0.0
  %667 = vmatpush1.msra.mxu0 0.0
  %668 = vmatprep.subr.mxu0 0.0
  %669 = vmatpush1.msra.mxu0 0.0
  %670 = vmatprep.subr.mxu0 0.0
  %671 = vmatpush1.msra.mxu0 0.0
  %672 = vmatprep.subr.mxu0 0.0
  %673 = vmatpush1.msra.mxu0 0.0
  %674 = vmatprep.subr.mxu0 0.0
  %675 = vmatpush1.msra.mxu0 0.0
  %676 = vmatprep.subr.mxu0 0.0
  %677 = vmatpush1.msra.mxu0 0.0
  %678 = vmatprep.subr.mxu0 0.0
  %679 = vmatpush1.msra.mxu0 0.0
  %680 = vmatprep.subr.mxu0 0.0
  %681 = vmatpush1.msra.mxu0 0.0
  %682 = vmatprep.subr.mxu0 0.0
  %683 = vmatpush1.msra.mxu0 0.0
  %684 = vmatprep.subr.mxu0 0.0
  %685 = vmatpush1.msra.mxu0 0.0
  %686 = vmatprep.subr.mxu0 0.0
  %687 = vmatpush1.msra.mxu0 0.0
  %688 = vmatprep.subr.mxu0 0.0
  %689 = vmatpush1.msra.mxu0 0.0
  %690 = vmatprep.subr.mxu0 0.0
  %691 = vmatpush1.msra.mxu0 0.0
  %692 = vmatprep.subr.mxu0 0.0
  %693 = vmatpush1.msra.mxu0 0.0
  %694 = vmatprep.subr.mxu0 0.0
  %695 = vmatpush1.msra.mxu0 0.0
  %696 = vmatprep.subr.mxu0 0.0
  %697 = vmatpush1.msra.mxu0 0.0
  %698 = vmatprep.subr.mxu0 0.0
  %699 = vmatpush1.msra.mxu0 0.0
  %700 = vmatprep.subr.mxu0 0.0
  %701 = vmatpush1.msra.mxu0 0.0
  %702 = vmatprep.subr.mxu0 0.0
  %703 = vmatpush1.msra.mxu0 0.0
  %704 = vmatprep.subr.mxu0 0.0
  %705 = vmatpush1.msra.mxu0 0.0
  %706 = vmatprep.subr.mxu0 0.0
  %707 = vmatpush1.msra.mxu0 0.0
  %708 = vmatprep.mubr.f32.mxu0 0.0
  %709 = vmatmul.mubr.f32.gmra.mrb[0].mxu0 %v642
  %v710 = vpop.f32.mrb[0].mxu0
  %v711 = vadd.f32 0.0, %v710
  %v712 = vpop.f32.mrb[0].mxu0
  %713 = vdwg.mxu0
  %v714 = vadd.f32 %v154, %v711
  %v715 = vtanh.pop %v714
  %717 = vrot.lane.b32.xlu0 %v640, 32
  %v718 = vpop.permute.xlu0 %717
  %v720 = vsel %vm177, %v715, %v718
  %v722 = vsel %vm258, %v720, 0
  %724 = vmatprep.subr.mxu0 0.0
  %725 = vmatpush1.msra.mxu0 %v20
  %726 = vmatprep.subr.mxu0 0.0
  %727 = vmatpush1.msra.mxu0 %v21
  %728 = vmatprep.subr.mxu0 0.0
  %729 = vmatpush1.msra.mxu0 %v22
  %730 = vmatprep.subr.mxu0 0.0
  %731 = vmatpush1.msra.mxu0 %v23
  %732 = vmatprep.subr.mxu0 0.0
  %733 = vmatpush1.msra.mxu0 %v24
  %734 = vmatprep.subr.mxu0 0.0
  %735 = vmatpush1.msra.mxu0 %v25
  %736 = vmatprep.subr.mxu0 0.0
  %737 = vmatpush1.msra.mxu0 %v26
  %738 = vmatprep.subr.mxu0 0.0
  %739 = vmatpush1.msra.mxu0 %v27
  %740 = vmatprep.subr.mxu0 0.0
  %741 = vmatpush1.msra.mxu0 0.0
  %742 = vmatprep.subr.mxu0 0.0
  %743 = vmatpush1.msra.mxu0 0.0
  %744 = vmatprep.subr.mxu0 0.0
  %745 = vmatpush1.msra.mxu0 0.0
  %746 = vmatprep.subr.mxu0 0.0
  %747 = vmatpush1.msra.mxu0 0.0
  %748 = vmatprep.subr.mxu0 0.0
  %749 = vmatpush1.msra.mxu0 0.0
  %750 = vmatprep.subr.mxu0 0.0
  %751 = vmatpush1.msra.mxu0 0.0
  %752 = vmatprep.subr.mxu0 0.0
  %753 = vmatpush1.msra.mxu0 0.0
  %754 = vmatprep.subr.mxu0 0.0
  %755 = vmatpush1.msra.mxu0 0.0
  %756 = vmatprep.subr.mxu0 0.0
  %757 = vmatpush1.msra.mxu0 0.0
  %758 = vmatprep.subr.mxu0 0.0
  %759 = vmatpush1.msra.mxu0 0.0
  %760 = vmatprep.subr.mxu0 0.0
  %761 = vmatpush1.msra.mxu0 0.0
  %762 = vmatprep.subr.mxu0 0.0
  %763 = vmatpush1.msra.mxu0 0.0
  %764 = vmatprep.subr.mxu0 0.0
  %765 = vmatpush1.msra.mxu0 0.0
  %766 = vmatprep.subr.mxu0 0.0
  %767 = vmatpush1.msra.mxu0 0.0
  %768 = vmatprep.subr.mxu0 0.0
  %769 = vmatpush1.msra.mxu0 0.0
  %770 = vmatprep.subr.mxu0 0.0
  %771 = vmatpush1.msra.mxu0 0.0
  %772 = vmatprep.subr.mxu0 0.0
  %773 = vmatpush1.msra.mxu0 0.0
  %774 = vmatprep.subr.mxu0 0.0
  %775 = vmatpush1.msra.mxu0 0.0
  %776 = vmatprep.subr.mxu0 0.0
  %777 = vmatpush1.msra.mxu0 0.0
  %778 = vmatprep.subr.mxu0 0.0
  %779 = vmatpush1.msra.mxu0 0.0
  %780 = vmatprep.subr.mxu0 0.0
  %781 = vmatpush1.msra.mxu0 0.0
  %782 = vmatprep.subr.mxu0 0.0
  %783 = vmatpush1.msra.mxu0 0.0
  %784 = vmatprep.subr.mxu0 0.0
  %785 = vmatpush1.msra.mxu0 0.0
  %786 = vmatprep.subr.mxu0 0.0
  %787 = vmatpush1.msra.mxu0 0.0
  %788 = vmatprep.mubr.f32.mxu0 0.0
  %789 = vmatmul.mubr.f32.gmra.mrb[0].mxu0 %v722
  %v790 = vpop.f32.mrb[0].mxu0
  %v791 = vadd.f32 %v257, %v790
  %v792 = vpop.f32.mrb[0].mxu0
  %793 = vdwg.mxu0
  %v794 = vtanh.pop %v791
  %v796 = vsel %vm177, %v715, 0
  %798 = vmatprep.subr.mxu0 0.0
  %799 = vmatpush1.msra.mxu0 %v16
  %800 = vmatprep.subr.mxu0 0.0
  %801 = vmatpush1.msra.mxu0 %v17
  %802 = vmatprep.subr.mxu0 0.0
  %803 = vmatpush1.msra.mxu0 %v18
  %804 = vmatprep.subr.mxu0 0.0
  %805 = vmatpush1.msra.mxu0 %v19
  %806 = vmatprep.subr.mxu0 0.0
  %807 = vmatpush1.msra.mxu0 0.0
  %808 = vmatprep.subr.mxu0 0.0
  %809 = vmatpush1.msra.mxu0 0.0
  %810 = vmatprep.subr.mxu0 0.0
  %811 = vmatpush1.msra.mxu0 0.0
  %812 = vmatprep.subr.mxu0 0.0
  %813 = vmatpush1.msra.mxu0 0.0
  %814 = vmatprep.subr.mxu0 0.0
  %815 = vmatpush1.msra.mxu0 0.0
  %816 = vmatprep.subr.mxu0 0.0
  %817 = vmatpush1.msra.mxu0 0.0
  %818 = vmatprep.subr.mxu0 0.0
  %819 = vmatpush1.msra.mxu0 0.0
  %820 = vmatprep.subr.mxu0 0.0
  %821 = vmatpush1.msra.mxu0 0.0
  %822 = vmatprep.subr.mxu0 0.0
  %823 = vmatpush1.msra.mxu0 0.0
  %824 = vmatprep.subr.mxu0 0.0
  %825 = vmatpush1.msra.mxu0 0.0
  %826 = vmatprep.subr.mxu0 0.0
  %827 = vmatpush1.msra.mxu0 0.0
  %828 = vmatprep.subr.mxu0 0.0
  %829 = vmatpush1.msra.mxu0 0.0
  %830 = vmatprep.subr.mxu0 0.0
  %831 = vmatpush1.msra.mxu0 0.0
  %832 = vmatprep.subr.mxu0 0.0
  %833 = vmatpush1.msra.mxu0 0.0
  %834 = vmatprep.subr.mxu0 0.0
  %835 = vmatpush1.msra.mxu0 0.0
  %836 = vmatprep.subr.mxu0 0.0
  %837 = vmatpush1.msra.mxu0 0.0
  %838 = vmatprep.subr.mxu0 0.0
  %839 = vmatpush1.msra.mxu0 0.0
  %840 = vmatprep.subr.mxu0 0.0
  %841 = vmatpush1.msra.mxu0 0.0
  %842 = vmatprep.subr.mxu0 0.0
  %843 = vmatpush1.msra.mxu0 0.0
  %844 = vmatprep.subr.mxu0 0.0
  %845 = vmatpush1.msra.mxu0 0.0
  %846 = vmatprep.subr.mxu0 0.0
  %847 = vmatpush1.msra.mxu0 0.0
  %848 = vmatprep.subr.mxu0 0.0
  %849 = vmatpush1.msra.mxu0 0.0
  %850 = vmatprep.subr.mxu0 0.0
  %851 = vmatpush1.msra.mxu0 0.0
  %852 = vmatprep.subr.mxu0 0.0
  %853 = vmatpush1.msra.mxu0 0.0
  %854 = vmatprep.subr.mxu0 0.0
  %855 = vmatpush1.msra.mxu0 0.0
  %856 = vmatprep.subr.mxu0 0.0
  %857 = vmatpush1.msra.mxu0 0.0
  %858 = vmatprep.subr.mxu0 0.0
  %859 = vmatpush1.msra.mxu0 0.0
  %860 = vmatprep.subr.mxu0 0.0
  %861 = vmatpush1.msra.mxu0 0.0
  %862 = vmatprep.mubr.f32.mxu0 0.0
  %863 = vmatmul.mubr.f32.gmra.mrb[0].mxu0 %v796
  %v864 = vpop.f32.mrb[0].mxu0
  %v865 = vadd.f32 0.0, %v864
  %v866 = vpop.f32.mrb[0].mxu0
  %867 = vdwg.mxu0
  %v868 = vadd.f32 %v159, %v865
  %v869 = vtanh.pop %v868
  %871 = vrot.lane.b32.xlu0 %v794, 32
  %v872 = vpop.permute.xlu0 %871
  %v874 = vsel %vm177, %v869, %v872
  %v876 = vsel %vm258, %v874, 0
  %878 = vmatprep.subr.mxu0 0.0
  %879 = vmatpush1.msra.mxu0 %v20
  %880 = vmatprep.subr.mxu0 0.0
  %881 = vmatpush1.msra.mxu0 %v21
  %882 = vmatprep.subr.mxu0 0.0
  %883 = vmatpush1.msra.mxu0 %v22
  %884 = vmatprep.subr.mxu0 0.0
  %885 = vmatpush1.msra.mxu0 %v23
  %886 = vmatprep.subr.mxu0 0.0
  %887 = vmatpush1.msra.mxu0 %v24
  %888 = vmatprep.subr.mxu0 0.0
  %889 = vmatpush1.msra.mxu0 %v25
  %890 = vmatprep.subr.mxu0 0.0
  %891 = vmatpush1.msra.mxu0 %v26
  %892 = vmatprep.subr.mxu0 0.0
  %893 = vmatpush1.msra.mxu0 %v27
  %894 = vmatprep.subr.mxu0 0.0
  %895 = vmatpush1.msra.mxu0 0.0
  %896 = vmatprep.subr.mxu0 0.0
  %897 = vmatpush1.msra.mxu0 0.0
  %898 = vmatprep.subr.mxu0 0.0
  %899 = vmatpush1.msra.mxu0 0.0
  %900 = vmatprep.subr.mxu0 0.0
  %901 = vmatpush1.msra.mxu0 0.0
  %902 = vmatprep.subr.mxu0 0.0
  %903 = vmatpush1.msra.mxu0 0.0
  %904 = vmatprep.subr.mxu0 0.0
  %905 = vmatpush1.msra.mxu0 0.0
  %906 = vmatprep.subr.mxu0 0.0
  %907 = vmatpush1.msra.mxu0 0.0
  %908 = vmatprep.subr.mxu0 0.0
  %909 = vmatpush1.msra.mxu0 0.0
  %910 = vmatprep.subr.mxu0 0.0
  %911 = vmatpush1.msra.mxu0 0.0
  %912 = vmatprep.subr.mxu0 0.0
  %913 = vmatpush1.msra.mxu0 0.0
  %914 = vmatprep.subr.mxu0 0.0
  %915 = vmatpush1.msra.mxu0 0.0
  %916 = vmatprep.subr.mxu0 0.0
  %917 = vmatpush1.msra.mxu0 0.0
  %918 = vmatprep.subr.mxu0 0.0
  %919 = vmatpush1.msra.mxu0 0.0
  %920 = vmatprep.subr.mxu0 0.0
  %921 = vmatpush1.msra.mxu0 0.0
  %922 = vmatprep.subr.mxu0 0.0
  %923 = vmatpush1.msra.mxu0 0.0
  %924 = vmatprep.subr.mxu0 0.0
  %925 = vmatpush1.msra.mxu0 0.0
  %926 = vmatprep.subr.mxu0 0.0
  %927 = vmatpush1.msra.mxu0 0.0
  %928 = vmatprep.subr.mxu0 0.0
  %929 = vmatpush1.msra.mxu0 0.0
  %930 = vmatprep.subr.mxu0 0.0
  %931 = vmatpush1.msra.mxu0 0.0
  %932 = vmatprep.subr.mxu0 0.0
  %933 = vmatpush1.msra.mxu0 0.0
  %934 = vmatprep.subr.mxu0 0.0
  %935 = vmatpush1.msra.mxu0 0.0
  %936 = vmatprep.subr.mxu0 0.0
  %937 = vmatpush1.msra.mxu0 0.0
  %938 = vmatprep.subr.mxu0 0.0
  %939 = vmatpush1.msra.mxu0 0.0
  %940 = vmatprep.subr.mxu0 0.0
  %941 = vmatpush1.msra.mxu0 0.0
  %942 = vmatprep.mubr.f32.mxu0 0.0
  %943 = vmatmul.mubr.f32.gmra.mrb[0].mxu0 %v876
  %v944 = vpop.f32.mrb[0].mxu0
  %v945 = vadd.f32 %v257, %v944
  %v946 = vpop.f32.mrb[0].mxu0
  %947 = vdwg.mxu0
  %v948 = vtanh.pop %v945
  %v950 = vsel %vm177, %v869, 0
  %952 = vmatprep.subr.mxu0 0.0
  %953 = vmatpush1.msra.mxu0 %v16
  %954 = vmatprep.subr.mxu0 0.0
  %955 = vmatpush1.msra.mxu0 %v17
  %956 = vmatprep.subr.mxu0 0.0
  %957 = vmatpush1.msra.mxu0 %v18
  %958 = vmatprep.subr.mxu0 0.0
  %959 = vmatpush1.msra.mxu0 %v19
  %960 = vmatprep.subr.mxu0 0.0
  %961 = vmatpush1.msra.mxu0 0.0
  %962 = vmatprep.subr.mxu0 0.0
  %963 = vmatpush1.msra.mxu0 0.0
  %964 = vmatprep.subr.mxu0 0.0
  %965 = vmatpush1.msra.mxu0 0.0
  %966 = vmatprep.subr.mxu0 0.0
  %967 = vmatpush1.msra.mxu0 0.0
  %968 = vmatprep.subr.mxu0 0.0
  %969 = vmatpush1.msra.mxu0 0.0
  %970 = vmatprep.subr.mxu0 0.0
  %971 = vmatpush1.msra.mxu0 0.0
  %972 = vmatprep.subr.mxu0 0.0
  %973 = vmatpush1.msra.mxu0 0.0
  %974 = vmatprep.subr.mxu0 0.0
  %975 = vmatpush1.msra.mxu0 0.0
  %976 = vmatprep.subr.mxu0 0.0
  %977 = vmatpush1.msra.mxu0 0.0
  %978 = vmatprep.subr.mxu0 0.0
  %979 = vmatpush1.msra.mxu0 0.0
  %980 = vmatprep.subr.mxu0 0.0
  %981 = vmatpush1.msra.mxu0 0.0
  %982 = vmatprep.subr.mxu0 0.0
  %983 = vmatpush1.msra.mxu0 0.0
  %984 = vmatprep.subr.mxu0 0.0
  %985 = vmatpush1.msra.mxu0 0.0
  %986 = vmatprep.subr.mxu0 0.0
  %987 = vmatpush1.msra.mxu0 0.0
  %988 = vmatprep.subr.mxu0 0.0
  %989 = vmatpush1.msra.mxu0 0.0
  %990 = vmatprep.subr.mxu0 0.0
  %991 = vmatpush1.msra.mxu0 0.0
  %992 = vmatprep.subr.mxu0 0.0
  %993 = vmatpush1.msra.mxu0 0.0
  %994 = vmatprep.subr.mxu0 0.0
  %995 = vmatpush1.msra.mxu0 0.0
  %996 = vmatprep.subr.mxu0 0.0
  %997 = vmatpush1.msra.mxu0 0.0
  %998 = vmatprep.subr.mxu0 0.0
  %999 = vmatpush1.msra.mxu0 0.0
  %1000 = vmatprep.subr.mxu0 0.0
  %1001 = vmatpush1.msra.mxu0 0.0
  %1002 = vmatprep.subr.mxu0 0.0
  %1003 = vmatpush1.msra.mxu0 0.0
  %1004 = vmatprep.subr.mxu0 0.0
  %1005 = vmatpush1.msra.mxu0 0.0
  %1006 = vmatprep.subr.mxu0 0.0
  %1007 = vmatpush1.msra.mxu0 0.0
  %1008 = vmatprep.subr.mxu0 0.0
  %1009 = vmatpush1.msra.mxu0 0.0
  %1010 = vmatprep.subr.mxu0 0.0
  %1011 = vmatpush1.msra.mxu0 0.0
  %1012 = vmatprep.subr.mxu0 0.0
  %1013 = vmatpush1.msra.mxu0 0.0
  %1014 = vmatprep.subr.mxu0 0.0
  %1015 = vmatpush1.msra.mxu0 0.0
  %1016 = vmatprep.mubr.f32.mxu0 0.0
  %1017 = vmatmul.mubr.f32.gmra.mrb[0].mxu0 %v950
  %v1018 = vpop.f32.mrb[0].mxu0
  %v1019 = vadd.f32 0.0, %v1018
  %v1020 = vpop.f32.mrb[0].mxu0
  %1021 = vdwg.mxu0
  %v1022 = vadd.f32 %v164, %v1019
  %v1023 = vtanh.pop %v1022
  %1025 = vrot.lane.b32.xlu0 %v948, 32
  %v1026 = vpop.permute.xlu0 %1025
  %v1028 = vsel %vm177, %v1023, %v1026
  %v1030 = vsel %vm258, %v1028, 0
  %1032 = vmatprep.subr.mxu0 0.0
  %1033 = vmatpush1.msra.mxu0 %v20
  %1034 = vmatprep.subr.mxu0 0.0
  %1035 = vmatpush1.msra.mxu0 %v21
  %1036 = vmatprep.subr.mxu0 0.0
  %1037 = vmatpush1.msra.mxu0 %v22
  %1038 = vmatprep.subr.mxu0 0.0
  %1039 = vmatpush1.msra.mxu0 %v23
  %1040 = vmatprep.subr.mxu0 0.0
  %1041 = vmatpush1.msra.mxu0 %v24
  %1042 = vmatprep.subr.mxu0 0.0
  %1043 = vmatpush1.msra.mxu0 %v25
  %1044 = vmatprep.subr.mxu0 0.0
  %1045 = vmatpush1.msra.mxu0 %v26
  %1046 = vmatprep.subr.mxu0 0.0
  %1047 = vmatpush1.msra.mxu0 %v27
  %1048 = vmatprep.subr.mxu0 0.0
  %1049 = vmatpush1.msra.mxu0 0.0
  %1050 = vmatprep.subr.mxu0 0.0
  %1051 = vmatpush1.msra.mxu0 0.0
  %1052 = vmatprep.subr.mxu0 0.0
  %1053 = vmatpush1.msra.mxu0 0.0
  %1054 = vmatprep.subr.mxu0 0.0
  %1055 = vmatpush1.msra.mxu0 0.0
  %1056 = vmatprep.subr.mxu0 0.0
  %1057 = vmatpush1.msra.mxu0 0.0
  %1058 = vmatprep.subr.mxu0 0.0
  %1059 = vmatpush1.msra.mxu0 0.0
  %1060 = vmatprep.subr.mxu0 0.0
  %1061 = vmatpush1.msra.mxu0 0.0
  %1062 = vmatprep.subr.mxu0 0.0
  %1063 = vmatpush1.msra.mxu0 0.0
  %1064 = vmatprep.subr.mxu0 0.0
  %1065 = vmatpush1.msra.mxu0 0.0
  %1066 = vmatprep.subr.mxu0 0.0
  %1067 = vmatpush1.msra.mxu0 0.0
  %1068 = vmatprep.subr.mxu0 0.0
  %1069 = vmatpush1.msra.mxu0 0.0
  %1070 = vmatprep.subr.mxu0 0.0
  %1071 = vmatpush1.msra.mxu0 0.0
  %1072 = vmatprep.subr.mxu0 0.0
  %1073 = vmatpush1.msra.mxu0 0.0
  %1074 = vmatprep.subr.mxu0 0.0
  %1075 = vmatpush1.msra.mxu0 0.0
  %1076 = vmatprep.subr.mxu0 0.0
  %1077 = vmatpush1.msra.mxu0 0.0
  %1078 = vmatprep.subr.mxu0 0.0
  %1079 = vmatpush1.msra.mxu0 0.0
  %1080 = vmatprep.subr.mxu0 0.0
  %1081 = vmatpush1.msra.mxu0 0.0
  %1082 = vmatprep.subr.mxu0 0.0
  %1083 = vmatpush1.msra.mxu0 0.0
  %1084 = vmatprep.subr.mxu0 0.0
  %1085 = vmatpush1.msra.mxu0 0.0
  %1086 = vmatprep.subr.mxu0 0.0
  %1087 = vmatpush1.msra.mxu0 0.0
  %1088 = vmatprep.subr.mxu0 0.0
  %1089 = vmatpush1.msra.mxu0 0.0
  %1090 = vmatprep.subr.mxu0 0.0
  %1091 = vmatpush1.msra.mxu0 0.0
  %1092 = vmatprep.subr.mxu0 0.0
  %1093 = vmatpush1.msra.mxu0 0.0
  %1094 = vmatprep.subr.mxu0 0.0
  %1095 = vmatpush1.msra.mxu0 0.0
  %1096 = vmatprep.mubr.f32.mxu0 0.0
  %1097 = vmatmul.mubr.f32.gmra.mrb[0].mxu0 %v1030
  %v1098 = vpop.f32.mrb[0].mxu0
  %v1099 = vadd.f32 %v257, %v1098
  %v1100 = vpop.f32.mrb[0].mxu0
  %1101 = vdwg.mxu0
  %v1102 = vtanh.pop %v1099
  %v1104 = vsel %vm177, %v1023, 0
  %1106 = vmatprep.subr.mxu0 0.0
  %1107 = vmatpush1.msra.mxu0 %v16
  %1108 = vmatprep.subr.mxu0 0.0
  %1109 = vmatpush1.msra.mxu0 %v17
  %1110 = vmatprep.subr.mxu0 0.0
  %1111 = vmatpush1.msra.mxu0 %v18
  %1112 = vmatprep.subr.mxu0 0.0
  %1113 = vmatpush1.msra.mxu0 %v19
  %1114 = vmatprep.subr.mxu0 0.0
  %1115 = vmatpush1.msra.mxu0 0.0
  %1116 = vmatprep.subr.mxu0 0.0
  %1117 = vmatpush1.msra.mxu0 0.0
  %1118 = vmatprep.subr.mxu0 0.0
  %1119 = vmatpush1.msra.mxu0 0.0
  %1120 = vmatprep.subr.mxu0 0.0
  %1121 = vmatpush1.msra.mxu0 0.0
  %1122 = vmatprep.subr.mxu0 0.0
  %1123 = vmatpush1.msra.mxu0 0.0
  %1124 = vmatprep.subr.mxu0 0.0
  %1125 = vmatpush1.msra.mxu0 0.0
  %1126 = vmatprep.subr.mxu0 0.0
  %1127 = vmatpush1.msra.mxu0 0.0
  %1128 = vmatprep.subr.mxu0 0.0
  %1129 = vmatpush1.msra.mxu0 0.0
  %1130 = vmatprep.subr.mxu0 0.0
  %1131 = vmatpush1.msra.mxu0 0.0
  %1132 = vmatprep.subr.mxu0 0.0
  %1133 = vmatpush1.msra.mxu0 0.0
  %1134 = vmatprep.subr.mxu0 0.0
  %1135 = vmatpush1.msra.mxu0 0.0
  %1136 = vmatprep.subr.mxu0 0.0
  %1137 = vmatpush1.msra.mxu0 0.0
  %1138 = vmatprep.subr.mxu0 0.0
  %1139 = vmatpush1.msra.mxu0 0.0
  %1140 = vmatprep.subr.mxu0 0.0
  %1141 = vmatpush1.msra.mxu0 0.0
  %1142 = vmatprep.subr.mxu0 0.0
  %1143 = vmatpush1.msra.mxu0 0.0
  %1144 = vmatprep.subr.mxu0 0.0
  %1145 = vmatpush1.msra.mxu0 0.0
  %1146 = vmatprep.subr.mxu0 0.0
  %1147 = vmatpush1.msra.mxu0 0.0
  %1148 = vmatprep.subr.mxu0 0.0
  %1149 = vmatpush1.msra.mxu0 0.0
  %1150 = vmatprep.subr.mxu0 0.0
  %1151 = vmatpush1.msra.mxu0 0.0
  %1152 = vmatprep.subr.mxu0 0.0
  %1153 = vmatpush1.msra.mxu0 0.0
  %1154 = vmatprep.subr.mxu0 0.0
  %1155 = vmatpush1.msra.mxu0 0.0
  %1156 = vmatprep.subr.mxu0 0.0
  %1157 = vmatpush1.msra.mxu0 0.0
  %1158 = vmatprep.subr.mxu0 0.0
  %1159 = vmatpush1.msra.mxu0 0.0
  %1160 = vmatprep.subr.mxu0 0.0
  %1161 = vmatpush1.msra.mxu0 0.0
  %1162 = vmatprep.subr.mxu0 0.0
  %1163 = vmatpush1.msra.mxu0 0.0
  %1164 = vmatprep.subr.mxu0 0.0
  %1165 = vmatpush1.msra.mxu0 0.0
  %1166 = vmatprep.subr.mxu0 0.0
  %1167 = vmatpush1.msra.mxu0 0.0
  %1168 = vmatprep.subr.mxu0 0.0
  %1169 = vmatpush1.msra.mxu0 0.0
  %1170 = vmatprep.mubr.f32.mxu0 0.0
  %1171 = vmatmul.mubr.f32.gmra.mrb[0].mxu0 %v1104
  %v1172 = vpop.f32.mrb[0].mxu0
  %v1173 = vadd.f32 0.0, %v1172
  %v1174 = vpop.f32.mrb[0].mxu0
  %1175 = vdwg.mxu0
  %v1176 = vadd.f32 %v169, %v1173
  %v1177 = vtanh.pop %v1176
  %1179 = vrot.lane.b32.xlu0 %v1102, 32
  %v1180 = vpop.permute.xlu0 %1179
  %v1182 = vsel %vm177, %v1177, %v1180
  %v1184 = vsel %vm258, %v1182, 0
  %1186 = vmatprep.subr.mxu0 0.0
  %1187 = vmatpush1.msra.mxu0 %v20
  %1188 = vmatprep.subr.mxu0 0.0
  %1189 = vmatpush1.msra.mxu0 %v21
  %1190 = vmatprep.subr.mxu0 0.0
  %1191 = vmatpush1.msra.mxu0 %v22
  %1192 = vmatprep.subr.mxu0 0.0
  %1193 = vmatpush1.msra.mxu0 %v23
  %1194 = vmatprep.subr.mxu0 0.0
  %1195 = vmatpush1.msra.mxu0 %v24
  %1196 = vmatprep.subr.mxu0 0.0
  %1197 = vmatpush1.msra.mxu0 %v25
  %1198 = vmatprep.subr.mxu0 0.0
  %1199 = vmatpush1.msra.mxu0 %v26
  %1200 = vmatprep.subr.mxu0 0.0
  %1201 = vmatpush1.msra.mxu0 %v27
  %1202 = vmatprep.subr.mxu0 0.0
  %1203 = vmatpush1.msra.mxu0 0.0
  %1204 = vmatprep.subr.mxu0 0.0
  %1205 = vmatpush1.msra.mxu0 0.0
  %1206 = vmatprep.subr.mxu0 0.0
  %1207 = vmatpush1.msra.mxu0 0.0
  %1208 = vmatprep.subr.mxu0 0.0
  %1209 = vmatpush1.msra.mxu0 0.0
  %1210 = vmatprep.subr.mxu0 0.0
  %1211 = vmatpush1.msra.mxu0 0.0
  %1212 = vmatprep.subr.mxu0 0.0
  %1213 = vmatpush1.msra.mxu0 0.0
  %1214 = vmatprep.subr.mxu0 0.0
  %1215 = vmatpush1.msra.mxu0 0.0
  %1216 = vmatprep.subr.mxu0 0.0
  %1217 = vmatpush1.msra.mxu0 0.0
  %1218 = vmatprep.subr.mxu0 0.0
  %1219 = vmatpush1.msra.mxu0 0.0
  %1220 = vmatprep.subr.mxu0 0.0
  %1221 = vmatpush1.msra.mxu0 0.0
  %1222 = vmatprep.subr.mxu0 0.0
  %1223 = vmatpush1.msra.mxu0 0.0
  %1224 = vmatprep.subr.mxu0 0.0
  %1225 = vmatpush1.msra.mxu0 0.0
  %1226 = vmatprep.subr.mxu0 0.0
  %1227 = vmatpush1.msra.mxu0 0.0
  %1228 = vmatprep.subr.mxu0 0.0
  %1229 = vmatpush1.msra.mxu0 0.0
  %1230 = vmatprep.subr.mxu0 0.0
  %1231 = vmatpush1.msra.mxu0 0.0
  %1232 = vmatprep.subr.mxu0 0.0
  %1233 = vmatpush1.msra.mxu0 0.0
  %1234 = vmatprep.subr.mxu0 0.0
  %1235 = vmatpush1.msra.mxu0 0.0
  %1236 = vmatprep.subr.mxu0 0.0
  %1237 = vmatpush1.msra.mxu0 0.0
  %1238 = vmatprep.subr.mxu0 0.0
  %1239 = vmatpush1.msra.mxu0 0.0
  %1240 = vmatprep.subr.mxu0 0.0
  %1241 = vmatpush1.msra.mxu0 0.0
  %1242 = vmatprep.subr.mxu0 0.0
  %1243 = vmatpush1.msra.mxu0 0.0
  %1244 = vmatprep.subr.mxu0 0.0
  %1245 = vmatpush1.msra.mxu0 0.0
  %1246 = vmatprep.subr.mxu0 0.0
  %1247 = vmatpush1.msra.mxu0 0.0
  %1248 = vmatprep.subr.mxu0 0.0
  %1249 = vmatpush1.msra.mxu0 0.0
  %1250 = vmatprep.mubr.f32.mxu0 0.0
  %1251 = vmatmul.mubr.f32.gmra.mrb[0].mxu0 %v1184
  %v1252 = vpop.f32.mrb[0].mxu0
  %v1253 = vadd.f32 %v257, %v1252
  %v1254 = vpop.f32.mrb[0].mxu0
  %1255 = vdwg.mxu0
  %v1256 = vtanh.pop %v1253
  %v1258 = vsel %vm177, %v1177, 0
  %1260 = vmatprep.subr.mxu0 0.0
  %1261 = vmatpush1.msra.mxu0 %v16
  %1262 = vmatprep.subr.mxu0 0.0
  %1263 = vmatpush1.msra.mxu0 %v17
  %1264 = vmatprep.subr.mxu0 0.0
  %1265 = vmatpush1.msra.mxu0 %v18
  %1266 = vmatprep.subr.mxu0 0.0
  %1267 = vmatpush1.msra.mxu0 %v19
  %1268 = vmatprep.subr.mxu0 0.0
  %1269 = vmatpush1.msra.mxu0 0.0
  %1270 = vmatprep.subr.mxu0 0.0
  %1271 = vmatpush1.msra.mxu0 0.0
  %1272 = vmatprep.subr.mxu0 0.0
  %1273 = vmatpush1.msra.mxu0 0.0
  %1274 = vmatprep.subr.mxu0 0.0
  %1275 = vmatpush1.msra.mxu0 0.0
  %1276 = vmatprep.subr.mxu0 0.0
  %1277 = vmatpush1.msra.mxu0 0.0
  %1278 = vmatprep.subr.mxu0 0.0
  %1279 = vmatpush1.msra.mxu0 0.0
  %1280 = vmatprep.subr.mxu0 0.0
  %1281 = vmatpush1.msra.mxu0 0.0
  %1282 = vmatprep.subr.mxu0 0.0
  %1283 = vmatpush1.msra.mxu0 0.0
  %1284 = vmatprep.subr.mxu0 0.0
  %1285 = vmatpush1.msra.mxu0 0.0
  %1286 = vmatprep.subr.mxu0 0.0
  %1287 = vmatpush1.msra.mxu0 0.0
  %1288 = vmatprep.subr.mxu0 0.0
  %1289 = vmatpush1.msra.mxu0 0.0
  %1290 = vmatprep.subr.mxu0 0.0
  %1291 = vmatpush1.msra.mxu0 0.0
  %1292 = vmatprep.subr.mxu0 0.0
  %1293 = vmatpush1.msra.mxu0 0.0
  %1294 = vmatprep.subr.mxu0 0.0
  %1295 = vmatpush1.msra.mxu0 0.0
  %1296 = vmatprep.subr.mxu0 0.0
  %1297 = vmatpush1.msra.mxu0 0.0
  %1298 = vmatprep.subr.mxu0 0.0
  %1299 = vmatpush1.msra.mxu0 0.0
  %1300 = vmatprep.subr.mxu0 0.0
  %1301 = vmatpush1.msra.mxu0 0.0
  %1302 = vmatprep.subr.mxu0 0.0
  %1303 = vmatpush1.msra.mxu0 0.0
  %1304 = vmatprep.subr.mxu0 0.0
  %1305 = vmatpush1.msra.mxu0 0.0
  %1306 = vmatprep.subr.mxu0 0.0
  %1307 = vmatpush1.msra.mxu0 0.0
  %1308 = vmatprep.subr.mxu0 0.0
  %1309 = vmatpush1.msra.mxu0 0.0
  %1310 = vmatprep.subr.mxu0 0.0
  %1311 = vmatpush1.msra.mxu0 0.0
  %1312 = vmatprep.subr.mxu0 0.0
  %1313 = vmatpush1.msra.mxu0 0.0
  %1314 = vmatprep.subr.mxu0 0.0
  %1315 = vmatpush1.msra.mxu0 0.0
  %1316 = vmatprep.subr.mxu0 0.0
  %1317 = vmatpush1.msra.mxu0 0.0
  %1318 = vmatprep.subr.mxu0 0.0
  %1319 = vmatpush1.msra.mxu0 0.0
  %1320 = vmatprep.subr.mxu0 0.0
  %1321 = vmatpush1.msra.mxu0 0.0
  %1322 = vmatprep.subr.mxu0 0.0
  %1323 = vmatpush1.msra.mxu0 0.0
  %1324 = vmatprep.mubr.f32.mxu0 0.0
  %1325 = vmatmul.mubr.f32.gmra.mrb[0].mxu0 %v1258
  %v1326 = vpop.f32.mrb[0].mxu0
  %v1327 = vadd.f32 0.0, %v1326
  %v1328 = vpop.f32.mrb[0].mxu0
  %1329 = vdwg.mxu0
  %v1330 = vadd.f32 %v174, %v1327
  %v1331 = vtanh.pop %v1330
  %1333 = vrot.lane.b32.xlu0 %v1256, 32
  %v1334 = vpop.permute.xlu0 %1333
  %v1336 = vsel %vm177, %v1331, %v1334
  %v1338 = vsel %vm258, %v1336, 0
  %1340 = vmatprep.subr.mxu0 0.0
  %1341 = vmatpush1.msra.mxu0 %v20
  %1342 = vmatprep.subr.mxu0 0.0
  %1343 = vmatpush1.msra.mxu0 %v21
  %1344 = vmatprep.subr.mxu0 0.0
  %1345 = vmatpush1.msra.mxu0 %v22
  %1346 = vmatprep.subr.mxu0 0.0
  %1347 = vmatpush1.msra.mxu0 %v23
  %1348 = vmatprep.subr.mxu0 0.0
  %1349 = vmatpush1.msra.mxu0 %v24
  %1350 = vmatprep.subr.mxu0 0.0
  %1351 = vmatpush1.msra.mxu0 %v25
  %1352 = vmatprep.subr.mxu0 0.0
  %1353 = vmatpush1.msra.mxu0 %v26
  %1354 = vmatprep.subr.mxu0 0.0
  %1355 = vmatpush1.msra.mxu0 %v27
  %1356 = vmatprep.subr.mxu0 0.0
  %1357 = vmatpush1.msra.mxu0 0.0
  %1358 = vmatprep.subr.mxu0 0.0
  %1359 = vmatpush1.msra.mxu0 0.0
  %1360 = vmatprep.subr.mxu0 0.0
  %1361 = vmatpush1.msra.mxu0 0.0
  %1362 = vmatprep.subr.mxu0 0.0
  %1363 = vmatpush1.msra.mxu0 0.0
  %1364 = vmatprep.subr.mxu0 0.0
  %1365 = vmatpush1.msra.mxu0 0.0
  %1366 = vmatprep.subr.mxu0 0.0
  %1367 = vmatpush1.msra.mxu0 0.0
  %1368 = vmatprep.subr.mxu0 0.0
  %1369 = vmatpush1.msra.mxu0 0.0
  %1370 = vmatprep.subr.mxu0 0.0
  %1371 = vmatpush1.msra.mxu0 0.0
  %1372 = vmatprep.subr.mxu0 0.0
  %1373 = vmatpush1.msra.mxu0 0.0
  %1374 = vmatprep.subr.mxu0 0.0
  %1375 = vmatpush1.msra.mxu0 0.0
  %1376 = vmatprep.subr.mxu0 0.0
  %1377 = vmatpush1.msra.mxu0 0.0
  %1378 = vmatprep.subr.mxu0 0.0
  %1379 = vmatpush1.msra.mxu0 0.0
  %1380 = vmatprep.subr.mxu0 0.0
  %1381 = vmatpush1.msra.mxu0 0.0
  %1382 = vmatprep.subr.mxu0 0.0
  %1383 = vmatpush1.msra.mxu0 0.0
  %1384 = vmatprep.subr.mxu0 0.0
  %1385 = vmatpush1.msra.mxu0 0.0
  %1386 = vmatprep.subr.mxu0 0.0
  %1387 = vmatpush1.msra.mxu0 0.0
  %1388 = vmatprep.subr.mxu0 0.0
  %1389 = vmatpush1.msra.mxu0 0.0
  %1390 = vmatprep.subr.mxu0 0.0
  %1391 = vmatpush1.msra.mxu0 0.0
  %1392 = vmatprep.subr.mxu0 0.0
  %1393 = vmatpush1.msra.mxu0 0.0
  %1394 = vmatprep.subr.mxu0 0.0
  %1395 = vmatpush1.msra.mxu0 0.0
  %1396 = vmatprep.subr.mxu0 0.0
  %1397 = vmatpush1.msra.mxu0 0.0
  %1398 = vmatprep.subr.mxu0 0.0
  %1399 = vmatpush1.msra.mxu0 0.0
  %1400 = vmatprep.subr.mxu0 0.0
  %1401 = vmatpush1.msra.mxu0 0.0
  %1402 = vmatprep.subr.mxu0 0.0
  %1403 = vmatpush1.msra.mxu0 0.0
  %1404 = vmatprep.mubr.f32.mxu0 0.0
  %1405 = vmatmul.mubr.f32.gmra.mrb[0].mxu0 %v1338
  %v1406 = vpop.f32.mrb[0].mxu0
  %v1407 = vadd.f32 %v257, %v1406
  %v1408 = vpop.f32.mrb[0].mxu0
  %1409 = vdwg.mxu0
  %v1410 = vtanh.pop %v1407
  %v1411 = vlaneseq
  %v1412 = vshrl.u32 %v1411, 7
  %v1413 = vsub.s32 0, %v1412
  %v1414 = vrot.slane %v34, %v1413
  %v1416 = vsel %vm177, %v1410, 0
  %1418 = vmatprep.subr.mxu0 0.0
  %1419 = vmatpush1.msra.mxu0 %v28
  %1420 = vmatprep.subr.mxu0 0.0
  %1421 = vmatpush1.msra.mxu0 %v29
  %1422 = vmatprep.subr.mxu0 0.0
  %1423 = vmatpush1.msra.mxu0 %v30
  %1424 = vmatprep.subr.mxu0 0.0
  %1425 = vmatpush1.msra.mxu0 %v31
  %1426 = vmatprep.subr.mxu0 0.0
  %1427 = vmatpush1.msra.mxu0 0.0
  %1428 = vmatprep.subr.mxu0 0.0
  %1429 = vmatpush1.msra.mxu0 0.0
  %1430 = vmatprep.subr.mxu0 0.0
  %1431 = vmatpush1.msra.mxu0 0.0
  %1432 = vmatprep.subr.mxu0 0.0
  %1433 = vmatpush1.msra.mxu0 0.0
  %1434 = vmatprep.subr.mxu0 0.0
  %1435 = vmatpush1.msra.mxu0 0.0
  %1436 = vmatprep.subr.mxu0 0.0
  %1437 = vmatpush1.msra.mxu0 0.0
  %1438 = vmatprep.subr.mxu0 0.0
  %1439 = vmatpush1.msra.mxu0 0.0
  %1440 = vmatprep.subr.mxu0 0.0
  %1441 = vmatpush1.msra.mxu0 0.0
  %1442 = vmatprep.subr.mxu0 0.0
  %1443 = vmatpush1.msra.mxu0 0.0
  %1444 = vmatprep.subr.mxu0 0.0
  %1445 = vmatpush1.msra.mxu0 0.0
  %1446 = vmatprep.subr.mxu0 0.0
  %1447 = vmatpush1.msra.mxu0 0.0
  %1448 = vmatprep.subr.mxu0 0.0
  %1449 = vmatpush1.msra.mxu0 0.0
  %1450 = vmatprep.subr.mxu0 0.0
  %1451 = vmatpush1.msra.mxu0 0.0
  %1452 = vmatprep.subr.mxu0 0.0
  %1453 = vmatpush1.msra.mxu0 0.0
  %1454 = vmatprep.subr.mxu0 0.0
  %1455 = vmatpush1.msra.mxu0 0.0
  %1456 = vmatprep.subr.mxu0 0.0
  %1457 = vmatpush1.msra.mxu0 0.0
  %1458 = vmatprep.subr.mxu0 0.0
  %1459 = vmatpush1.msra.mxu0 0.0
  %1460 = vmatprep.subr.mxu0 0.0
  %1461 = vmatpush1.msra.mxu0 0.0
  %1462 = vmatprep.subr.mxu0 0.0
  %1463 = vmatpush1.msra.mxu0 0.0
  %1464 = vmatprep.subr.mxu0 0.0
  %1465 = vmatpush1.msra.mxu0 0.0
  %1466 = vmatprep.subr.mxu0 0.0
  %1467 = vmatpush1.msra.mxu0 0.0
  %1468 = vmatprep.subr.mxu0 0.0
  %1469 = vmatpush1.msra.mxu0 0.0
  %1470 = vmatprep.subr.mxu0 0.0
  %1471 = vmatpush1.msra.mxu0 0.0
  %1472 = vmatprep.subr.mxu0 0.0
  %1473 = vmatpush1.msra.mxu0 0.0
  %1474 = vmatprep.subr.mxu0 0.0
  %1475 = vmatpush1.msra.mxu0 0.0
  %1476 = vmatprep.subr.mxu0 0.0
  %1477 = vmatpush1.msra.mxu0 0.0
  %1478 = vmatprep.subr.mxu0 0.0
  %1479 = vmatpush1.msra.mxu0 0.0
  %1480 = vmatprep.subr.mxu0 0.0
  %1481 = vmatpush1.msra.mxu0 0.0
  %1482 = vmatprep.mubr.f32.mxu0 0.0
  %1483 = vmatmul.mubr.f32.gmra.mrb[0].mxu0 %v1416
  %v1484 = vpop.f32.mrb[0].mxu0
  %v1485 = vadd.f32 %v1414, %v1484
  %v1486 = vpop.f32.mrb[0].mxu0
  %1487 = vdwg.mxu0
  %1488 = vst.msk [vmem:[%s3] sm:$0xff] %vm177, %v1485
  // Predicated region
  $region14: #{rnn_model_forward.1} parent=0 // pred_check
    _
  $region15: #{rnn_model_forward.1} parent=0 // pred_check_branch
    %1490 = sbr.rel (0) target = $region17
  $region16: #{rnn_model_forward.1} parent=0 // pred_region
    _
  $region17: #{rnn_model_forward.1} parent=0 // pred_fallthru
    _
  // Predicated region
  $region18: #{rnn_model_forward.1} parent=0 // pred_check
    _
  $region19: #{rnn_model_forward.1} parent=0 // pred_check_branch
    %1492 = sbr.rel (0) target = $region21
  $region20: #{rnn_model_forward.1} parent=0 // pred_region
    _
  $region21: #{rnn_model_forward.1} parent=0 // pred_fallthru
    _

</llo_original>
